<compile_context>
chip_gen: v6e
topology: v6e:2x2x1
jax: 0.10.0
libtpu: 0.0.40
codegen_flags: <defaults>
</compile_context>

<pallas_src>
import math
import functools

import jax
import jax.numpy as jnp
from jax import lax
from jax.experimental import pallas as pl
from jax.experimental.pallas import tpu as pltpu


# -----------------------------------------------------------------------------
# Small helpers
# -----------------------------------------------------------------------------
def _pick_tile(n, cands=(256, 128, 64)):
    if n <= cands[0]:
        return n
    for c in cands:
        if n % c == 0:
            return c
    # TODO(synk): pad ragged sequence lengths up to a multiple of 256 instead of
    # falling back to a single full-extent tile.
    return n


def _compiler_params(dim_sems, est_bytes):
    try:
        cap = int(pltpu.get_tpu_info().vmem_capacity_bytes)
    except Exception:
        cap = 64 << 20                       # conservative (v7x per-TC VMEM)
    limit = int(min(max(int(est_bytes) + (4 << 20), 32 << 20), int(cap * 0.9)))
    return pltpu.CompilerParams(dimension_semantics=dim_sems,
                                vmem_limit_bytes=limit)


def _smoke_copy_kernel(x_ref, o_ref):
    o_ref[...] = x_ref[...]


_BUFFERED_OK = None


def _buffered_ok():
    """Check once whether pipeline_mode=pl.Buffered(1) is usable on this jax."""
    global _BUFFERED_OK
    if _BUFFERED_OK is not None:
        return _BUFFERED_OK
    if not hasattr(pl, "Buffered"):
        _BUFFERED_OK = False
        return False
    try:
        spec = pl.BlockSpec((8, 128), lambda i: (0, 0),
                            pipeline_mode=pl.Buffered(1))
        out = pl.pallas_call(
            _smoke_copy_kernel,
            out_shape=jax.ShapeDtypeStruct((8, 128), jnp.float32),
            grid=(1,),
            in_specs=[spec],
            out_specs=pl.BlockSpec((8, 128), lambda i: (0, 0)),
        )(jnp.zeros((8, 128), jnp.float32))
        jax.block_until_ready(out)
        _BUFFERED_OK = True
    except Exception:
        _BUFFERED_OK = False
    return _BUFFERED_OK


def _const_spec(shape):
    """Full-array, grid-invariant BlockSpec; single-buffered when supported."""
    nd = len(shape)
    idx = lambda *_, _nd=nd: (0,) * _nd
    if _buffered_ok():
        return pl.BlockSpec(shape, idx, pipeline_mode=pl.Buffered(1))
    return pl.BlockSpec(shape, idx)


# -----------------------------------------------------------------------------
# Kernels
# -----------------------------------------------------------------------------
def qkv_proj_kernel(x_ref, wq_ref, bq_ref, wk_ref, bk_ref, wv_ref, bv_ref,
                    q_ref, k_ref, v_ref, *, n_heads):
    x = x_ref[0].astype(jnp.bfloat16)                # (tm, D)
    tm, D = x.shape
    hd = D // n_heads

    def proj(w_ref, b_ref):
        y = (jnp.dot(x, w_ref[...], preferred_element_type=jnp.float32)
             + b_ref[...])
        y = y.astype(jnp.bfloat16).reshape(tm, n_heads, hd)
        return jnp.swapaxes(y, 0, 1)                 # (H, tm, hd), head-major

    q_ref[0] = proj(wq_ref, bq_ref)                  # 1/sqrt(hd) folded into wq
    k_ref[0] = proj(wk_ref, bk_ref)
    v_ref[0] = proj(wv_ref, bv_ref)


def flash_attn_kernel(xq_ref, q_ref, k_ref, v_ref, wo_ref, bo_ref,
                      ln1g_ref, ln1b_ref, o_ref,
                      m_sc, l_sc, acc_sc, *, block_q, block_k):
    qi = pl.program_id(1)
    ki = pl.program_id(2)

    @pl.when(ki == 0)
    def _init():
        m_sc[...] = jnp.full(m_sc.shape, -1e30, jnp.float32)
        l_sc[...] = jnp.zeros_like(l_sc)
        acc_sc[...] = jnp.zeros_like(acc_sc)

    @pl.when(ki <= qi)       # causal: skip fully-masked kv tiles
    def _compute():
        q = q_ref[0]                                 # (H, tq, hd) bf16
        k = k_ref[0]                                 # (H, tk, hd) bf16
        v = v_ref[0]                                 # (H, tk, hd) bf16
        s = jnp.einsum("hqd,hkd->hqk", q, k,
                       preferred_element_type=jnp.float32)   # (H, tq, tk)

        row = qi * block_q + lax.broadcasted_iota(jnp.int32, (block_q, block_k), 0)
        col = ki * block_k + lax.broadcasted_iota(jnp.int32, (block_q, block_k), 1)
        s = jnp.where((col > row)[None, :, :], -1e30, s)

        m_prev = m_sc[...]
        m_new = jnp.maximum(m_prev, jnp.max(s, axis=-1, keepdims=True))
        alpha = jnp.exp(m_prev - m_new)
        p = jnp.exp(s - m_new)
        # TODO(synk): attention dropout (p=0.2) omitted (eval-mode identity).
        l_sc[...] = alpha * l_sc[...] + jnp.sum(p, axis=-1, keepdims=True)
        acc_sc[...] = alpha * acc_sc[...] + jnp.einsum(
            "hqk,hkd->hqd", p.astype(jnp.bfloat16), v,
            preferred_element_type=jnp.float32)
        m_sc[...] = m_new

    @pl.when(ki == qi)       # last visited kv tile for this query tile
    def _finalize():
        inv_l = pl.reciprocal(l_sc[...], approx=True)
        ctx = (acc_sc[...] * inv_l).astype(jnp.bfloat16)      # (H, tq, hd)
        # fc_out folded over the head axis: no (H,tq,hd)->(tq,D) relayout.
        att_h = lax.dot_general(ctx, wo_ref[...],
                                dimension_numbers=(((2,), (1,)), ((0,), (0,))),
                                preferred_element_type=jnp.float32)  # (H, tq, D)
        att = jnp.sum(att_h, axis=0) + bo_ref[...]
        z = xq_ref[0] + att
        mu = jnp.mean(z, axis=-1, keepdims=True)
        var = jnp.mean((z - mu) ** 2, axis=-1, keepdims=True)
        o_ref[0] = ((z - mu) * lax.rsqrt(var + 1e-5)
                    * ln1g_ref[...] + ln1b_ref[...])


def ffn_kernel(x_ref, w1_ref, b1_ref, w2_ref, b2_ref, ln2g_ref, ln2b_ref,
               o_ref, acc_sc):
    j = pl.program_id(1)

    @pl.when(j == 0)
    def _init():
        acc_sc[...] = jnp.zeros_like(acc_sc)

    x = x_ref[...]                                    # (tm, D) f32 (adn residual)
    # TODO(synk): residual dropout (p=0.2) omitted (eval-mode identity).
    h = (jnp.dot(x.astype(jnp.bfloat16), w1_ref[...],
                 preferred_element_type=jnp.float32) + b1_ref[...])    # (tm, th)
    h = 0.5 * h * (1.0 + lax.erf(h * (1.0 / math.sqrt(2.0))))          # exact GELU
    acc_sc[...] += jnp.dot(h.astype(jnp.bfloat16), w2_ref[...],
                           preferred_element_type=jnp.float32)

    @pl.when(j == pl.num_programs(1) - 1)
    def _finalize():
        z = acc_sc[...] + b2_ref[...] + x
        mu = jnp.mean(z, axis=-1, keepdims=True)
        var = jnp.mean((z - mu) ** 2, axis=-1, keepdims=True)
        o_ref[...] = ((z - mu) * lax.rsqrt(var + 1e-5)
                      * ln2g_ref[...] + ln2b_ref[...])


def lm_head_kernel(x_ref, w_ref, b_ref, o_ref):
    # x tile (tm, D) f32 (cast here, no wrapper-side pass), w tile (tn, D) bf16
    # (tied embedding rows, contracted on D — no transposed table copy).
    x = x_ref[...].astype(jnp.bfloat16)
    o_ref[...] = (
        lax.dot_general(x, w_ref[...],
                        dimension_numbers=(((1,), (1,)), ((), ())),
                        preferred_element_type=jnp.float32)
        + b_ref[...]
    )


# -----------------------------------------------------------------------------
# Wrappers
# -----------------------------------------------------------------------------
def run_qkv_proj(x, blk, n_heads):
    B, S, D = x.shape
    H = n_heads
    hd = D // H
    tm = _pick_tile(S)
    num_m = S // tm

    weights = (blk["wq"], blk["bq"], blk["wk"], blk["bk"], blk["wv"], blk["bv"])
    w_bytes = sum(int(a.size) * a.dtype.itemsize for a in weights)
    est = w_bytes + 2 * (tm * D * 4) + 3 * 2 * (H * tm * hd * 2)

    out_sds = jax.ShapeDtypeStruct((B, H, S, hd), jnp.bfloat16)
    out_spec = pl.BlockSpec((1, H, tm, hd), lambda b, i: (b, 0, i, 0))

    return pl.pallas_call(
        functools.partial(qkv_proj_kernel, n_heads=n_heads),
        out_shape=(out_sds, out_sds, out_sds),
        grid=(B, num_m),
        in_specs=[pl.BlockSpec((1, tm, D), lambda b, i: (b, i, 0))]
                 + [_const_spec(w.shape) for w in weights],
        out_specs=(out_spec, out_spec, out_spec),
        compiler_params=_compiler_params(("parallel", "parallel"), est),
    )(x, *weights)


def run_flash_attention(x, q, k, v, blk, n_heads):
    B, S, D = x.shape
    H = n_heads
    hd = D // H
    tq = _pick_tile(S)
    tk = tq
    num_q = S // tq
    num_k = S // tk

    wo_h = blk["wo"].reshape(H, hd, D)      # (H, hd, D) bf16 view of (D, D)
    bo, ln1g, ln1b = blk["bo"], blk["ln1_g"], blk["ln1_b"]

    # Causal clamp: for ki > qi keep fetching the qi tile (block index unchanged
    # -> no extra DMA) instead of streaming tiles whose compute is skipped.
    kv_map = lambda b, qi, ki: (b, 0, jnp.minimum(ki, qi), 0)

    est = (int(wo_h.size) * 2 + (int(bo.size) + int(ln1g.size) + int(ln1b.size)) * 4
           + 2 * 2 * (tq * D * 4)                  # xq + adn tiles (f32, dbl buf)
           + 2 * (H * tq * hd * 2)                 # q tile
           + 2 * 2 * (H * tk * hd * 2)             # k, v tiles
           + (2 * H * tq + H * tq * hd) * 4        # online-softmax scratch
           + H * tq * tk * 4)                      # per-tile score intermediate

    return pl.pallas_call(
        functools.partial(flash_attn_kernel, block_q=tq, block_k=tk),
        out_shape=jax.ShapeDtypeStruct((B, S, D), jnp.float32),
        grid=(B, num_q, num_k),
        in_specs=[
            pl.BlockSpec((1, tq, D), lambda b, qi, ki: (b, qi, 0)),      # residual
            pl.BlockSpec((1, H, tq, hd), lambda b, qi, ki: (b, 0, qi, 0)),
            pl.BlockSpec((1, H, tk, hd), kv_map),
            pl.BlockSpec((1, H, tk, hd), kv_map),
            _const_spec(wo_h.shape),
            _const_spec(bo.shape),
            _const_spec(ln1g.shape),
            _const_spec(ln1b.shape),
        ],
        out_specs=pl.BlockSpec((1, tq, D), lambda b, qi, ki: (b, qi, 0)),
        scratch_shapes=[
            pltpu.VMEM((H, tq, 1), jnp.float32),   # running max
            pltpu.VMEM((H, tq, 1), jnp.float32),   # running sum
            pltpu.VMEM((H, tq, hd), jnp.float32),  # accumulator
        ],
        compiler_params=_compiler_params(("parallel", "parallel", "arbitrary"), est),
    )(x, q, k, v, wo_h, bo, ln1g, ln1b)


def run_ffn(x2d, blk):
    M, D = x2d.shape
    H4 = blk["w1"].shape[1]
    tm = _pick_tile(M)
    th = _pick_tile(H4, (512, 256, 128))
    num_m, num_h = M // tm, H4 // th

    w1, b1, w2, b2 = blk["w1"], blk["b1"], blk["w2"], blk["b2"]
    ln2g, ln2b = blk["ln2_g"], blk["ln2_b"]

    est = (2 * (D * th * 2 + th * 4 + th * D * 2)            # streamed w1/b1/w2 tiles
           + (int(b2.size) + int(ln2g.size) + int(ln2b.size)) * 4
           + 2 * 2 * (tm * D * 4)                            # x + out tiles
           + tm * D * 4                                      # accumulator
           + tm * th * 4)                                    # h intermediate

    return pl.pallas_call(
        ffn_kernel,
        out_shape=jax.ShapeDtypeStruct((M, D), jnp.float32),
        grid=(num_m, num_h),
        in_specs=[
            pl.BlockSpec((tm, D), lambda i, j: (i, 0)),
            pl.BlockSpec((D, th), lambda i, j: (0, j)),
            pl.BlockSpec((1, th), lambda i, j: (0, j)),
            pl.BlockSpec((th, D), lambda i, j: (j, 0)),
            _const_spec(b2.shape),
            _const_spec(ln2g.shape),
            _const_spec(ln2b.shape),
        ],
        out_specs=pl.BlockSpec((tm, D), lambda i, j: (i, 0)),
        scratch_shapes=[pltpu.VMEM((tm, D), jnp.float32)],
        compiler_params=_compiler_params(("parallel", "arbitrary"), est),
    )(x2d, w1, b1, w2, b2, ln2g, ln2b)


def run_lm_head(x2d, wte_bf16, bias):
    M, D = x2d.shape
    V = wte_bf16.shape[0]
    tm = _pick_tile(M, (512, 256, 128, 64))
    tn = _pick_tile(V, (512, 256, 128))
    nm, nv = M // tm, V // tn
    b2d = bias.reshape(1, V)

    # HBM traffic: operand varying with the inner grid axis is re-streamed by the
    # outer extent.  Keep whichever operand is larger resident.
    m_outer_traffic = M * D * 4 + nm * (V * D * 2 + V * 4)   # x resident
    v_outer_traffic = V * D * 2 + V * 4 + nv * M * D * 4     # table resident
    est = 2 * (tm * D * 4 + tn * D * 2 + tn * 4 + tm * tn * 4)

    if v_outer_traffic <= m_outer_traffic:
        grid = (nv, nm)
        x_spec = pl.BlockSpec((tm, D), lambda vi, mi: (mi, 0))
        w_spec = pl.BlockSpec((tn, D), lambda vi, mi: (vi, 0))
        b_spec = pl.BlockSpec((1, tn), lambda vi, mi: (0, vi))
        o_spec = pl.BlockSpec((tm, tn), lambda vi, mi: (mi, vi))
    else:
        grid = (nm, nv)
        x_spec = pl.BlockSpec((tm, D), lambda mi, vi: (mi, 0))
        w_spec = pl.BlockSpec((tn, D), lambda mi, vi: (vi, 0))
        b_spec = pl.BlockSpec((1, tn), lambda mi, vi: (0, vi))
        o_spec = pl.BlockSpec((tm, tn), lambda mi, vi: (mi, vi))

    return pl.pallas_call(
        lm_head_kernel,
        out_shape=jax.ShapeDtypeStruct((M, V), jnp.float32),
        grid=grid,
        in_specs=[x_spec, w_spec, b_spec],
        out_specs=o_spec,
        compiler_params=_compiler_params(("parallel", "parallel"), est),
    )(x2d, wte_bf16, b2d)


def run_gpt_block(x, blk, n_heads):
    B, S, D = x.shape
    q, k, v = run_qkv_proj(x, blk, n_heads)             # K/V computed once/layer
    adn = run_flash_attention(x, q, k, v, blk, n_heads)  # attn + fc_out + res + ln1
    out = run_ffn(adn.reshape(B * S, D), blk)            # FFN + res + ln2
    return out.reshape(B, S, D)


# -----------------------------------------------------------------------------
# Model (parameter init + glue)
# -----------------------------------------------------------------------------
def make_positional_encoding(context_length, d_model):
    position = jnp.arange(context_length, dtype=jnp.float32)[:, None]
    div_term = jnp.exp(jnp.arange(0, d_model, 2, dtype=jnp.float32)
                       * (-math.log(10000.0) / d_model))
    pe = jnp.zeros((context_length, d_model), dtype=jnp.float32)
    pe = pe.at[:, 0::2].set(jnp.sin(position * div_term))
    pe = pe.at[:, 1::2].set(jnp.cos(position * div_term))
    return pe


def init_params(key, vocab_size, d_model, n_heads, n_layers):
    hd = d_model // n_heads
    scale = 1.0 / math.sqrt(hd)
    keys = jax.random.split(key, 2 * n_layers + 2)
    ki = iter(keys)

    def lin(k, fan_in, fan_out, col_scale=1.0):
        w = 0.02 * jax.random.normal(k, (fan_in, fan_out), dtype=jnp.float32)
        w = (w * col_scale).astype(jnp.bfloat16)        # MXU-input dtype
        b = jnp.zeros((1, fan_out), dtype=jnp.float32)
        return w, b

    blocks = []
    for _ in range(n_layers):
        k1, k2 = next(ki), next(ki)
        kq, kk, kv, ko = jax.random.split(k1, 4)
        kf1, kf2 = jax.random.split(k2, 2)
        # 1/sqrt(head_dim) folded into the query projection (one-time transform;
        # bq is zero so no bias rescale is needed).
        wq, bq = lin(kq, d_model, d_model, col_scale=scale)
        wk, bk = lin(kk, d_model, d_model)
        wv, bv = lin(kv, d_model, d_model)
        wo, bo = lin(ko, d_model, d_model)
        w1, b1 = lin(kf1, d_model, 4 * d_model)
        w2, b2 = lin(kf2, 4 * d_model, d_model)
        blocks.append(dict(
            wq=wq, bq=bq, wk=wk, bk=bk, wv=wv, bv=bv, wo=wo, bo=bo,
            ln1_g=jnp.ones((1, d_model), jnp.float32),
            ln1_b=jnp.zeros((1, d_model), jnp.float32),
            w1=w1, b1=b1, w2=w2, b2=b2,
            ln2_g=jnp.ones((1, d_model), jnp.float32),
            ln2_b=jnp.zeros((1, d_model), jnp.float32),
        ))

    wte = 0.02 * jax.random.normal(next(ki), (vocab_size, d_model), jnp.float32)
    lm_bias = jnp.zeros((vocab_size,), jnp.float32)
    # bf16 copy of the tied table for the LM head (one-time transform, halves table DMA).
    # TODO(synk): int8 LM-head table on v5e/v6e (fp8 on v7x) would halve it again.
    return dict(wte=wte, wte_bf16=wte.astype(jnp.bfloat16),
                lm_bias=lm_bias, blocks=blocks)


def gpt_forward(params, inputs, pe, n_heads, targets=None):
    B, S = inputs.shape
    wte = params["wte"]
    D = wte.shape[1]

    x = jnp.take(wte, inputs, axis=0) + pe[None, :S, :]       # (B, S, D) f32
    # TODO(synk): carry the residual stream as bf16 between kernels at large D/S
    # (kept f32 here for LayerNorm / residual accumulation accuracy).

    for blk in params["blocks"]:
        x = run_gpt_block(x, blk, n_heads)

    logits2d = run_lm_head(x.reshape(B * S, D), params["wte_bf16"],
                           params["lm_bias"])
    logits = logits2d.reshape(B, S, -1)

    loss = None
    if targets is not None:
        # TODO(synk): fuse cross-entropy (running logsumexp over V tiles) into the
        # LM-head kernel to avoid materializing (B*S, V) logits when only the loss
        # is needed.
        tgt = targets.reshape(B * S)
        lse = jax.nn.logsumexp(logits2d, axis=-1)
        nll = lse - jnp.take_along_axis(logits2d, tgt[:, None], axis=-1)[:, 0]
        loss = jnp.mean(nll)
    return logits, loss


# -----------------------------------------------------------------------------
# Pure-JAX reference (same stored weights, f32 math) for a correctness check
# -----------------------------------------------------------------------------
def _ref_block(x, blk, n_heads):
    B, S, D = x.shape
    H = n_heads
    hd = D // H

    def lin(inp, w, b):
        return inp @ w.astype(jnp.float32) + b

    q = lin(x, blk["wq"], blk["bq"])          # scale already folded into wq
    k = lin(x, blk["wk"], blk["bk"])
    v = lin(x, blk["wv"], blk["bv"])
    heads = lambda t: t.reshape(B, S, H, hd).transpose(0, 2, 1, 3)
    qh, kh, vh = heads(q), heads(k), heads(v)
    s = jnp.einsum("bhqd,bhkd->bhqk", qh, kh)
    mask = jnp.triu(jnp.ones((S, S), dtype=bool), k=1)
    s = jnp.where(mask[None, None], -jnp.inf, s)
    p = jax.nn.softmax(s, axis=-1)
    ctx = jnp.einsum("bhqk,bhkd->bhqd", p, vh)
    att = ctx.transpose(0, 2, 1, 3).reshape(B, S, D)
    att = lin(att, blk["wo"], blk["bo"])

    def ln(z, g, b):
        mu = z.mean(-1, keepdims=True)
        var = ((z - mu) ** 2).mean(-1, keepdims=True)
        return (z - mu) * lax.rsqrt(var + 1e-5) * g + b

    adn = ln(x + att, blk["ln1_g"], blk["ln1_b"])
    h = lin(adn, blk["w1"], blk["b1"])
    h = jax.nn.gelu(h, approximate=False)
    h = lin(h, blk["w2"], blk["b2"])
    return ln(h + adn, blk["ln2_g"], blk["ln2_b"])


def _ref_forward(params, inputs, pe, n_heads):
    B, S = inputs.shape
    x = jnp.take(params["wte"], inputs, axis=0) + pe[None, :S, :]
    for blk in params["blocks"]:
        x = _ref_block(x, blk, n_heads)
    w = params["wte_bf16"].astype(jnp.float32)
    return x @ w.T + params["lm_bias"][None, None, :]


# -----------------------------------------------------------------------------
if __name__ == "__main__":
    vocab_size = 64
    d_model = 32
    n_heads = 4
    n_layers = 2
    context_length = 16
    batch, seq = 2, 8

    key = jax.random.PRNGKey(0)
    pkey, ikey = jax.random.split(key)
    params = init_params(pkey, vocab_size, d_model, n_heads, n_layers)
    pe = make_positional_encoding(context_length, d_model)
    inputs = jax.random.randint(ikey, (batch, seq), 0, vocab_size, dtype=jnp.int32)

    logits, loss = gpt_forward(params, inputs, pe, n_heads, targets=None)
    logits = jax.block_until_ready(logits)

    assert logits.shape == (batch, seq, vocab_size)
    assert bool(jnp.all(jnp.isfinite(logits)))

    ref = _ref_forward(params, inputs, pe, n_heads)
    err = float(jnp.max(jnp.abs(logits - ref)))
    assert err < 3e-2, f"max abs error vs reference: {err}"

    print("KERNEL_OK")
</pallas_src>

<mosaic_0001>
module attributes {stable_mosaic.version = 11 : i64} {
  func.func @_smoke_copy_kernel(%arg0: i32, %arg1: memref<8x128xf32, #tpu.memory_space<vmem>>, %arg2: memref<8x128xf32, #tpu.memory_space<vmem>>) attributes {dimension_semantics = [#tpu.dimension_semantics<arbitrary>], iteration_bounds = array<i64: 1>, scalar_prefetch = 0 : i64, scratch_operands = 0 : i64, tpu.core_type = #tpu.core_type<tc>, window_params = [{pipeline_mode = #tpu.pipeline_mode<synchronous>, transform_indices = @transform_0, window_bounds = array<i64: 8, 128>}, {pipeline_mode = #tpu.pipeline_mode<synchronous>, transform_indices = @transform_1, window_bounds = array<i64: 8, 128>}]} {
    %c0 = arith.constant 0 : index
    %c0_0 = arith.constant 0 : index
    %0 = vector.load %arg1[%c0, %c0_0] : memref<8x128xf32, #tpu.memory_space<vmem>>, vector<8x128xf32>
    %c0_1 = arith.constant 0 : index
    %c0_2 = arith.constant 0 : index
    %1 = vector.load %arg2[%c0_1, %c0_2] : memref<8x128xf32, #tpu.memory_space<vmem>>, vector<8x128xf32>
    tpu.vector_store %arg2[%c0_1, %c0_2], %0 {strides = array<i32>} : memref<8x128xf32, #tpu.memory_space<vmem>>, vector<8x128xf32>,
    return
  }
  func.func @transform_0(%arg0: i32) -> (i32, i32) {
    %c0_i32 = arith.constant 0 : i32
    %c0_i32_0 = arith.constant 0 : i32
    %c0_i32_1 = arith.constant 0 : i32
    return %c0_i32, %c0_i32_0 : i32, i32
  }
  func.func @transform_1(%arg0: i32) -> (i32, i32) {
    %c0_i32 = arith.constant 0 : i32
    %c0_i32_0 = arith.constant 0 : i32
    %c0_i32_1 = arith.constant 0 : i32
    return %c0_i32, %c0_i32_0 : i32, i32
  }
}

module attributes {stable_mosaic.version = 11 : i64} {
  func.func @qkv_proj_kernel(%arg0: i32, %arg1: i32, %arg2: memref<1x8x32xf32, #tpu.memory_space<vmem>>, %arg3: memref<32x32xbf16, #tpu.memory_space<vmem>>, %arg4: memref<1x32xf32, #tpu.memory_space<vmem>>, %arg5: memref<32x32xbf16, #tpu.memory_space<vmem>>, %arg6: memref<1x32xf32, #tpu.memory_space<vmem>>, %arg7: memref<32x32xbf16, #tpu.memory_space<vmem>>, %arg8: memref<1x32xf32, #tpu.memory_space<vmem>>, %arg9: memref<1x4x8x8xbf16, #tpu.memory_space<vmem>>, %arg10: memref<1x4x8x8xbf16, #tpu.memory_space<vmem>>, %arg11: memref<1x4x8x8xbf16, #tpu.memory_space<vmem>>) attributes {dimension_semantics = [#tpu.dimension_semantics<parallel>, #tpu.dimension_semantics<parallel>], iteration_bounds = array<i64: 2, 1>, scalar_prefetch = 0 : i64, scratch_operands = 0 : i64, tpu.core_type = #tpu.core_type<tc>, window_params = [{transform_indices = @transform_0, window_bounds = array<i64: 1, 8, 32>}, {pipeline_mode = #tpu.pipeline_mode<synchronous>, transform_indices = @transform_1, window_bounds = array<i64: 32, 32>}, {pipeline_mode = #tpu.pipeline_mode<synchronous>, transform_indices = @transform_2, window_bounds = array<i64: 1, 32>}, {pipeline_mode = #tpu.pipeline_mode<synchronous>, transform_indices = @transform_3, window_bounds = array<i64: 32, 32>}, {pipeline_mode = #tpu.pipeline_mode<synchronous>, transform_indices = @transform_4, window_bounds = array<i64: 1, 32>}, {pipeline_mode = #tpu.pipeline_mode<synchronous>, transform_indices = @transform_5, window_bounds = array<i64: 32, 32>}, {pipeline_mode = #tpu.pipeline_mode<synchronous>, transform_indices = @transform_6, window_bounds = array<i64: 1, 32>}, {transform_indices = @transform_7, window_bounds = array<i64: 1, 4, 8, 8>}, {transform_indices = @transform_8, window_bounds = array<i64: 1, 4, 8, 8>}, {transform_indices = @transform_9, window_bounds = array<i64: 1, 4, 8, 8>}]} {
    %c0 = arith.constant 0 : index
    %c0_0 = arith.constant 0 : index
    %c0_1 = arith.constant 0 : index
    %0 = vector.load %arg2[%c0, %c0_0, %c0_1] : memref<1x8x32xf32, #tpu.memory_space<vmem>>, vector<1x8x32xf32>
    %1 = vector.shape_cast %0 : vector<1x8x32xf32> to vector<8x32xf32>
    %2 = arith.truncf %1 : vector<8x32xf32> to vector<8x32xbf16>
    %c0_2 = arith.constant 0 : index
    %c0_3 = arith.constant 0 : index
    %3 = vector.load %arg3[%c0_2, %c0_3] : memref<32x32xbf16, #tpu.memory_space<vmem>>, vector<32x32xbf16>
    %cst = arith.constant dense<0.000000e+00> : vector<8x32xf32>
    %4 = tpu.matmul %2, %3, %cst {dimension_numbers = #tpu.dot_dimension_numbers<[1], [0], [0], [1], [0, 0, 1, 1], [], []>} : vector<8x32xbf16>, vector<32x32xbf16>, vector<8x32xf32> -> vector<8x32xf32>
    %c0_4 = arith.constant 0 : index
    %c0_5 = arith.constant 0 : index
    %5 = vector.load %arg4[%c0_4, %c0_5] : memref<1x32xf32, #tpu.memory_space<vmem>>, vector<1x32xf32>
    %6 = vector.broadcast %5 : vector<1x32xf32> to vector<8x32xf32>
    %7 = arith.addf %4, %6 : vector<8x32xf32>
    %8 = arith.truncf %7 : vector<8x32xf32> to vector<8x32xbf16>
    %9 = vector.shape_cast %8 : vector<8x32xbf16> to vector<8x4x8xbf16>
    %10 = tpu.transpose %9, [1, 0, 2] : vector<8x4x8xbf16> -> vector<4x8x8xbf16>
    %c0_6 = arith.constant 0 : index
    %c0_7 = arith.constant 0 : index
    %c0_8 = arith.constant 0 : index
    %c0_9 = arith.constant 0 : index
    %11 = vector.load %arg9[%c0_6, %c0_7, %c0_8, %c0_9] : memref<1x4x8x8xbf16, #tpu.memory_space<vmem>>, vector<1x4x8x8xbf16>
    %12 = vector.shape_cast %11 : vector<1x4x8x8xbf16> to vector<4x8x8xbf16>
    %13 = vector.shape_cast %10 : vector<4x8x8xbf16> to vector<1x4x8x8xbf16>
    tpu.vector_store %arg9[%c0_6, %c0_7, %c0_8, %c0_9], %13 {strides = array<i32>} : memref<1x4x8x8xbf16, #tpu.memory_space<vmem>>, vector<1x4x8x8xbf16>,
    %c0_10 = arith.constant 0 : index
    %c0_11 = arith.constant 0 : index
    %14 = vector.load %arg5[%c0_10, %c0_11] : memref<32x32xbf16, #tpu.memory_space<vmem>>, vector<32x32xbf16>
    %cst_12 = arith.constant dense<0.000000e+00> : vector<8x32xf32>
    %15 = tpu.matmul %2, %14, %cst_12 {dimension_numbers = #tpu.dot_dimension_numbers<[1], [0], [0], [1], [0, 0, 1, 1], [], []>} : vector<8x32xbf16>, vector<32x32xbf16>, vector<8x32xf32> -> vector<8x32xf32>
    %c0_13 = arith.constant 0 : index
    %c0_14 = arith.constant 0 : index
    %16 = vector.load %arg6[%c0_13, %c0_14] : memref<1x32xf32, #tpu.memory_space<vmem>>, vector<1x32xf32>
    %17 = vector.broadcast %16 : vector<1x32xf32> to vector<8x32xf32>
    %18 = arith.addf %15, %17 : vector<8x32xf32>
    %19 = arith.truncf %18 : vector<8x32xf32> to vector<8x32xbf16>
    %20 = vector.shape_cast %19 : vector<8x32xbf16> to vector<8x4x8xbf16>
    %21 = tpu.transpose %20, [1, 0, 2] : vector<8x4x8xbf16> -> vector<4x8x8xbf16>
    %c0_15 = arith.constant 0 : index
    %c0_16 = arith.constant 0 : index
    %c0_17 = arith.constant 0 : index
    %c0_18 = arith.constant 0 : index
    %22 = vector.load %arg10[%c0_15, %c0_16, %c0_17, %c0_18] : memref<1x4x8x8xbf16, #tpu.memory_space<vmem>>, vector<1x4x8x8xbf16>
    %23 = vector.shape_cast %22 : vector<1x4x8x8xbf16> to vector<4x8x8xbf16>
    %24 = vector.shape_cast %21 : vector<4x8x8xbf16> to vector<1x4x8x8xbf16>
    tpu.vector_store %arg10[%c0_15, %c0_16, %c0_17, %c0_18], %24 {strides = array<i32>} : memref<1x4x8x8xbf16, #tpu.memory_space<vmem>>, vector<1x4x8x8xbf16>,
    %c0_19 = arith.constant 0 : index
    %c0_20 = arith.constant 0 : index
    %25 = vector.load %arg7[%c0_19, %c0_20] : memref<32x32xbf16, #tpu.memory_space<vmem>>, vector<32x32xbf16>
    %cst_21 = arith.constant dense<0.000000e+00> : vector<8x32xf32>
    %26 = tpu.matmul %2, %25, %cst_21 {dimension_numbers = #tpu.dot_dimension_numbers<[1], [0], [0], [1], [0, 0, 1, 1], [], []>} : vector<8x32xbf16>, vector<32x32xbf16>, vector<8x32xf32> -> vector<8x32xf32>
    %c0_22 = arith.constant 0 : index
    %c0_23 = arith.constant 0 : index
    %27 = vector.load %arg8[%c0_22, %c0_23] : memref<1x32xf32, #tpu.memory_space<vmem>>, vector<1x32xf32>
    %28 = vector.broadcast %27 : vector<1x32xf32> to vector<8x32xf32>
    %29 = arith.addf %26, %28 : vector<8x32xf32>
    %30 = arith.truncf %29 : vector<8x32xf32> to vector<8x32xbf16>
    %31 = vector.shape_cast %30 : vector<8x32xbf16> to vector<8x4x8xbf16>
    %32 = tpu.transpose %31, [1, 0, 2] : vector<8x4x8xbf16> -> vector<4x8x8xbf16>
    %c0_24 = arith.constant 0 : index
    %c0_25 = arith.constant 0 : index
    %c0_26 = arith.constant 0 : index
    %c0_27 = arith.constant 0 : index
    %33 = vector.load %arg11[%c0_24, %c0_25, %c0_26, %c0_27] : memref<1x4x8x8xbf16, #tpu.memory_space<vmem>>, vector<1x4x8x8xbf16>
    %34 = vector.shape_cast %33 : vector<1x4x8x8xbf16> to vector<4x8x8xbf16>
    %35 = vector.shape_cast %32 : vector<4x8x8xbf16> to vector<1x4x8x8xbf16>
    tpu.vector_store %arg11[%c0_24, %c0_25, %c0_26, %c0_27], %35 {strides = array<i32>} : memref<1x4x8x8xbf16, #tpu.memory_space<vmem>>, vector<1x4x8x8xbf16>,
    return
  }
  func.func @transform_0(%arg0: i32, %arg1: i32) -> (i32, i32, i32) {
    %c0_i32 = arith.constant 0 : i32
    %c0_i32_0 = arith.constant 0 : i32
    return %arg0, %arg1, %c0_i32 : i32, i32, i32
  }
  func.func @transform_1(%arg0: i32, %arg1: i32) -> (i32, i32) {
    %c0_i32 = arith.constant 0 : i32
    %c0_i32_0 = arith.constant 0 : i32
    %c0_i32_1 = arith.constant 0 : i32
    return %c0_i32, %c0_i32_0 : i32, i32
  }
  func.func @transform_2(%arg0: i32, %arg1: i32) -> (i32, i32) {
    %c0_i32 = arith.constant 0 : i32
    %c0_i32_0 = arith.constant 0 : i32
    %c0_i32_1 = arith.constant 0 : i32
    return %c0_i32, %c0_i32_0 : i32, i32
  }
  func.func @transform_3(%arg0: i32, %arg1: i32) -> (i32, i32) {
    %c0_i32 = arith.constant 0 : i32
    %c0_i32_0 = arith.constant 0 : i32
    %c0_i32_1 = arith.constant 0 : i32
    return %c0_i32, %c0_i32_0 : i32, i32
  }
  func.func @transform_4(%arg0: i32, %arg1: i32) -> (i32, i32) {
    %c0_i32 = arith.constant 0 : i32
    %c0_i32_0 = arith.constant 0 : i32
    %c0_i32_1 = arith.constant 0 : i32
    return %c0_i32, %c0_i32_0 : i32, i32
  }
  func.func @transform_5(%arg0: i32, %arg1: i32) -> (i32, i32) {
    %c0_i32 = arith.constant 0 : i32
    %c0_i32_0 = arith.constant 0 : i32
    %c0_i32_1 = arith.constant 0 : i32
    return %c0_i32, %c0_i32_0 : i32, i32
  }
  func.func @transform_6(%arg0: i32, %arg1: i32) -> (i32, i32) {
    %c0_i32 = arith.constant 0 : i32
    %c0_i32_0 = arith.constant 0 : i32
    %c0_i32_1 = arith.constant 0 : i32
    return %c0_i32, %c0_i32_0 : i32, i32
  }
  func.func @transform_7(%arg0: i32, %arg1: i32) -> (i32, i32, i32, i32) {
    %c0_i32 = arith.constant 0 : i32
    %c0_i32_0 = arith.constant 0 : i32
    %c0_i32_1 = arith.constant 0 : i32
    return %arg0, %c0_i32, %arg1, %c0_i32_0 : i32, i32, i32, i32
  }
  func.func @transform_8(%arg0: i32, %arg1: i32) -> (i32, i32, i32, i32) {
    %c0_i32 = arith.constant 0 : i32
    %c0_i32_0 = arith.constant 0 : i32
    %c0_i32_1 = arith.constant 0 : i32
    return %arg0, %c0_i32, %arg1, %c0_i32_0 : i32, i32, i32, i32
  }
  func.func @transform_9(%arg0: i32, %arg1: i32) -> (i32, i32, i32, i32) {
    %c0_i32 = arith.constant 0 : i32
    %c0_i32_0 = arith.constant 0 : i32
    %c0_i32_1 = arith.constant 0 : i32
    return %arg0, %c0_i32, %arg1, %c0_i32_0 : i32, i32, i32, i32
  }
}

</mosaic_0001>

<llo_original>
// kernel: tpu_custom_call.1
$region0: #{tpu_custom_call.1}
  #allocation0 [shape = 'u32[]', space=smem, size = 0x4, offset = 0x4, fixed_abs, tag = 'smem constant byte address 0x4 - core index']
  #allocation1 [shape = 'u32[144,128]{1,0:T(1,128)}', space=vmem, size = 0x12000, scoped, tag = 'internal scratch']
  %s0 = inlined_call_operand.hbm [shape: f32[8,128], index: 0, kind: input, shape index: {}]
  %s1 = inlined_call_operand.hbm [shape: f32[8,128], index: 1, kind: output, shape index: {}]
  %s2 = sld [smem:[#allocation0]]
  $region18: #{tpu_custom_call.1} parent=0
    _
  %s4 = ssub.s32 1, %s2
  %s5 = scalar_select 0, %s4, %s2
  $region1: #{tpu_custom_call.1} parent=0
    #allocation2 [shape = 'u8[4096]{0}', space=vmem, size = 0x1000, scoped, tag = 'input window, operand 0, single buffered']
    #allocation3 [shape = 's32[1]{0}', space=sflag, size = 0x4, scoped, tag = 'scoped memory for tpu_custom_call.1']
    #allocation4 [shape = 's32[1]{0}', space=sflag, size = 0x4, scoped, tag = 'scoped memory for tpu_custom_call.1']
    #allocation5 [shape = 'u8[4096]{0}', space=vmem, size = 0x1000, scoped, tag = 'output window, operand 0, single buffered']
    %6 = vsyncpa [#allocation3], 0
    %7 = vsyncpa [#allocation4], 0
    // Predicated region
    $region2: #{tpu_custom_call.1} parent=1 // pred_check
      _
    $region3: #{tpu_custom_call.1} parent=1 // pred_check_branch
      %9 = sbr.rel (0) target = $region5
    $region4: #{tpu_custom_call.1} parent=1 // pred_region
      %s11 = ssub.s32 128, 128
      %12 = vsyncadd [#allocation3], %s11
      %s14 = sshll.u32 [#allocation2], 4
      %s15 = int_to_ptr.vmem [resolvable:$true] %s14
      %17 = dma.hbm_to_vmem [thread:$0]  %s0, 128, %s15, [#allocation3]
    $region5: #{tpu_custom_call.1} parent=1 // pred_fallthru
      _
    // Predicated region
    $region6: #{tpu_custom_call.1} parent=1 // pred_check
      _
    $region7: #{tpu_custom_call.1} parent=1 // pred_check_branch
      %19 = sbr.rel (0) target = $region9
    $region8: #{tpu_custom_call.1} parent=1 // pred_region
      %20 = dma.done [#allocation3], 128
    $region9: #{tpu_custom_call.1} parent=1 // pred_fallthru
      _
    %v21 = vld [vmem:[#allocation2] sm:$0xff]
    %22 = vst [vmem:[#allocation5] sm:$0xff] %v21
    // Predicated region
    $region10: #{tpu_custom_call.1} parent=1 // pred_check
      _
    $region11: #{tpu_custom_call.1} parent=1 // pred_check_branch
      %24 = sbr.rel (0) target = $region13
    $region12: #{tpu_custom_call.1} parent=1 // pred_region
      %s26 = ssub.s32 128, 128
      %27 = vsyncadd [#allocation4], %s26
      %s29 = sshll.u32 [#allocation5], 4
      %s30 = int_to_ptr.vmem [resolvable:$true] %s29
      %32 = dma.vmem_to_hbm [thread:$0]  %s30, 128, %s1, [#allocation4]
    $region13: #{tpu_custom_call.1} parent=1 // pred_fallthru
      _
    // Predicated region
    $region14: #{tpu_custom_call.1} parent=1 // pred_check
      _
    $region15: #{tpu_custom_call.1} parent=1 // pred_check_branch
      %34 = sbr.rel (0) target = $region17
    $region16: #{tpu_custom_call.1} parent=1 // pred_region
      %35 = dma.done [#allocation4], 128
    $region17: #{tpu_custom_call.1} parent=1 // pred_fallthru
      _
    %36 = vsyncpa [#allocation3], 1
    %37 = vsyncpa [#allocation4], 1

// kernel: tpu_custom_call.1
$region0: #{tpu_custom_call.1}
  #allocation0 [shape = 'u32[]', space=smem, size = 0x4, offset = 0x4, fixed_abs, tag = 'smem constant byte address 0x4 - core index']
  #allocation1 [shape = 'u32[144,128]{1,0:T(1,128)}', space=vmem, size = 0x12000, scoped, tag = 'internal scratch']
  %s0 = inlined_call_operand.hbm [shape: f32[2,8,32], index: 0, kind: input, shape index: {}]
  %s1 = inlined_call_operand.hbm [shape: bf16[32,32], index: 1, kind: input, shape index: {}]
  %s2 = inlined_call_operand.vmem [shape: f32[1,32], index: 2, kind: input, shape index: {}]
  %s3 = inlined_call_operand.hbm [shape: bf16[32,32], index: 3, kind: input, shape index: {}]
  %s4 = inlined_call_operand.vmem [shape: f32[1,32], index: 4, kind: input, shape index: {}]
  %s5 = inlined_call_operand.hbm [shape: bf16[32,32], index: 5, kind: input, shape index: {}]
  %s6 = inlined_call_operand.vmem [shape: f32[1,32], index: 6, kind: input, shape index: {}]
  %s7 = inlined_call_operand.hbm [shape: bf16[2,4,8,8], index: 7, kind: output, shape index: {0}]
  %s8 = inlined_call_operand.hbm [shape: bf16[2,4,8,8], index: 8, kind: output, shape index: {1}]
  %s9 = inlined_call_operand.hbm [shape: bf16[2,4,8,8], index: 9, kind: output, shape index: {2}]
  %10 = xla_tuple %s7, %s8, %s9
  %s11 = sld [smem:[#allocation0]]
  $region93: #{tpu_custom_call.1} parent=0
    _
  %s13 = ssub.s32 1, %s11
  %s14 = scalar_select 0, %s13, %s11
  $region1: #{tpu_custom_call.1} parent=0
    #allocation2 [shape = 'u8[8192]{0}', space=vmem, size = 0x2000, scoped, tag = 'input window, operand 0']
    #allocation3 [shape = 's32[2]{0}', space=sflag, size = 0x8, scoped, tag = 'scoped memory for tpu_custom_call.1']
    #allocation4 [shape = 's32[2]{0}', space=sflag, size = 0x8, scoped, tag = 'scoped memory for tpu_custom_call.1']
    #allocation5 [shape = 'u8[8192]{0}', space=vmem, size = 0x2000, scoped, tag = 'input window, operand 1, single buffered']
    #allocation6 [shape = 's32[1]{0}', space=sflag, size = 0x4, scoped, tag = 'scoped memory for tpu_custom_call.1']
    #allocation7 [shape = 'u8[8192]{0}', space=vmem, size = 0x2000, scoped, tag = 'input window, operand 3, single buffered']
    #allocation8 [shape = 'u8[8192]{0}', space=vmem, size = 0x2000, scoped, tag = 'input window, operand 5, single buffered']
    #allocation9 [shape = 's32[1]{0}', space=sflag, size = 0x4, scoped, tag = 'scoped memory for tpu_custom_call.1']
    #allocation10 [shape = 'u8[16384]{0}', space=vmem, size = 0x4000, scoped, tag = 'output window, operand 0']
    #allocation11 [shape = 'u8[16384]{0}', space=vmem, size = 0x4000, scoped, tag = 'output window, operand 1']
    #allocation12 [shape = 's32[2]{0}', space=sflag, size = 0x8, scoped, tag = 'scoped memory for tpu_custom_call.1']
    #allocation13 [shape = 'u8[16384]{0}', space=vmem, size = 0x4000, scoped, tag = 'output window, operand 2']
    %15 = vsyncpa [#allocation3], 0
    %s16 = scalar_lea.sflag [#allocation3], 1
    %17 = vsyncpa %s16, 0
    %18 = vsyncpa [#allocation6], 0
    %19 = vsyncpa [#allocation9], 0
    %20 = vsyncpa [#allocation4], 0
    %s21 = scalar_lea.sflag [#allocation4], 1
    %22 = vsyncpa %s21, 0
    %23 = vsyncpa [#allocation12], 0
    %s24 = scalar_lea.sflag [#allocation12], 1
    %25 = vsyncpa %s24, 0
    loop: start=0, step=1, limit=4
    $region2: #{tpu_custom_call.1} parent=1 // loop_pre_header
      _
    $region3: #{tpu_custom_call.1} parent=1 // loop_header
      %s27 = sphi 0, %s31
      %p28 = scmp.ge.s32.totalorder %s27, 4
      %s34 = sphi 0, %s46
      %s35 = sphi 0, %s42
      %s36 = sphi 0, %s34
      %s37 = sphi 0, %s35
      %s38 = sphi 0, %s36
      %s39 = sphi 0, %s37
      %s51 = sphi 0, %s53
      %s54 = sphi 0, %s51
      %s55 = sphi 0, %s54
      %s71 = sphi 0, %s55
      %s75 = sphi 0, %s75
      %s77 = sphi 0, %s75
      %s78 = sphi 0, %s77
      %s92 = sphi 0, %s78
      %s96 = sphi 0, %s96
      %s98 = sphi 0, %s96
      %s99 = sphi 0, %s98
      %s113 = sphi 0, %s99
      %s117 = sphi 0, %s117
      %s119 = sphi 0, %s117
      %s120 = sphi 0, %s119
      %s134 = sphi 0, %s120
      %s138 = sphi 0, %s138
      %s140 = sphi 0, %s138
      %s141 = sphi 0, %s140
      %s155 = sphi 0, %s141
      %s159 = sphi 0, %s159
      %s161 = sphi 0, %s159
      %s162 = sphi 0, %s161
      %s176 = sphi 0, %s162
      %s180 = sphi 0, %s180
      %s182 = sphi 0, %s180
      %s183 = sphi 0, %s182
      %s197 = sphi 0, %s183
      %s205 = sphi 0, %s207
      %s208 = sphi 0, %s205
      %s209 = sphi 0, %s208
      %s225 = sphi 0, %s209
      %s233 = sphi 0, %s235
      %s236 = sphi 0, %s233
      %s237 = sphi 0, %s236
      %s253 = sphi 0, %s237
      %s261 = sphi 0, %s263
      %s264 = sphi 0, %s261
      %s265 = sphi 0, %s264
      %s281 = sphi 0, %s265
    $region4: #{tpu_custom_call.1} parent=1 // loop_header_branch
      %30 = sbr.rel (%p28) target = $region8
    $region5: #{tpu_custom_call.1} parent=1 // loop_body
      %s32 = ssub.s32 %s27, 1
      %s33 = ssub.s32 %s27, 2
      %s40 = sadd.s32 1, %s35
      %p41 = scmp.ge.s32.totalorder %s40, 1
      %s42 = scalar_select %p41, 0, %s40
      %s43 = sadd.s32 1, %s34
      %s44 = scalar_select %p41, %s43, %s34
      %p45 = scmp.ge.s32.totalorder %s44, 2
      %s46 = scalar_select %p45, 0, %s44
      %s47 = ssub.s32 %s34, %s46
      %s48 = ssub.s32 %s35, %s42
      %s49 = sor.u32 %s47, %s48
      %p50 = scmp.eq.s32.totalorder %s49, 0
      %s52 = sadd.s32 %s51, 1
      %s53 = scalar_select %p50, %s51, %s52
      %p56 = pneg %p50
      %p57 = scmp.eq.s32.totalorder %s27, 1
      %p58 = por %p56, %p57
      %p59 = scmp.ne.s32.totalorder %s51, %s54
      %p60 = scmp.eq.s32.totalorder %s27, 0
      %p61 = por %p59, %p60
      %p62 = scmp.ne.s32.totalorder %s51, %s54
      %p63 = scmp.eq.s32.totalorder %s32, 1
      %p64 = por %p62, %p63
      %p65 = scmp.ne.s32.totalorder %s54, %s55
      %p66 = scmp.eq.s32.totalorder %s32, 0
      %p67 = por %p65, %p66
      %p68 = scmp.ne.s32.totalorder %s54, %s55
      %p69 = scmp.eq.s32.totalorder %s33, 1
      %p70 = por %p68, %p69
      %p72 = scmp.ne.s32.totalorder %s55, %s71
      %p73 = scmp.eq.s32.totalorder %s33, 0
      %p74 = por %p72, %p73
      %s76 = sadd.s32 %s75, 1
      %p79 = scmp.eq.s32.totalorder %s27, 1
      %p80 = scmp.ne.s32.totalorder %s75, %s77
      %p81 = scmp.eq.s32.totalorder %s27, 0
      %p82 = por %p80, %p81
      %p83 = scmp.ne.s32.totalorder %s75, %s77
      %p84 = scmp.eq.s32.totalorder %s32, 1
      %p85 = por %p83, %p84
      %p86 = scmp.ne.s32.totalorder %s77, %s78
      %p87 = scmp.eq.s32.totalorder %s32, 0
      %p88 = por %p86, %p87
      %p89 = scmp.ne.s32.totalorder %s77, %s78
      %p90 = scmp.eq.s32.totalorder %s33, 1
      %p91 = por %p89, %p90
      %p93 = scmp.ne.s32.totalorder %s78, %s92
      %p94 = scmp.eq.s32.totalorder %s33, 0
      %p95 = por %p93, %p94
      %s97 = sadd.s32 %s96, 1
      %p100 = scmp.eq.s32.totalorder %s27, 1
      %p101 = scmp.ne.s32.totalorder %s96, %s98
      %p102 = scmp.eq.s32.totalorder %s27, 0
      %p103 = por %p101, %p102
      %p104 = scmp.ne.s32.totalorder %s96, %s98
      %p105 = scmp.eq.s32.totalorder %s32, 1
      %p106 = por %p104, %p105
      %p107 = scmp.ne.s32.totalorder %s98, %s99
      %p108 = scmp.eq.s32.totalorder %s32, 0
      %p109 = por %p107, %p108
      %p110 = scmp.ne.s32.totalorder %s98, %s99
      %p111 = scmp.eq.s32.totalorder %s33, 1
      %p112 = por %p110, %p111
      %p114 = scmp.ne.s32.totalorder %s99, %s113
      %p115 = scmp.eq.s32.totalorder %s33, 0
      %p116 = por %p114, %p115
      %s118 = sadd.s32 %s117, 1
      %p121 = scmp.eq.s32.totalorder %s27, 1
      %p122 = scmp.ne.s32.totalorder %s117, %s119
      %p123 = scmp.eq.s32.totalorder %s27, 0
      %p124 = por %p122, %p123
      %p125 = scmp.ne.s32.totalorder %s117, %s119
      %p126 = scmp.eq.s32.totalorder %s32, 1
      %p127 = por %p125, %p126
      %p128 = scmp.ne.s32.totalorder %s119, %s120
      %p129 = scmp.eq.s32.totalorder %s32, 0
      %p130 = por %p128, %p129
      %p131 = scmp.ne.s32.totalorder %s119, %s120
      %p132 = scmp.eq.s32.totalorder %s33, 1
      %p133 = por %p131, %p132
      %p135 = scmp.ne.s32.totalorder %s120, %s134
      %p136 = scmp.eq.s32.totalorder %s33, 0
      %p137 = por %p135, %p136
      %s139 = sadd.s32 %s138, 1
      %p142 = scmp.eq.s32.totalorder %s27, 1
      %p143 = scmp.ne.s32.totalorder %s138, %s140
      %p144 = scmp.eq.s32.totalorder %s27, 0
      %p145 = por %p143, %p144
      %p146 = scmp.ne.s32.totalorder %s138, %s140
      %p147 = scmp.eq.s32.totalorder %s32, 1
      %p148 = por %p146, %p147
      %p149 = scmp.ne.s32.totalorder %s140, %s141
      %p150 = scmp.eq.s32.totalorder %s32, 0
      %p151 = por %p149, %p150
      %p152 = scmp.ne.s32.totalorder %s140, %s141
      %p153 = scmp.eq.s32.totalorder %s33, 1
      %p154 = por %p152, %p153
      %p156 = scmp.ne.s32.totalorder %s141, %s155
      %p157 = scmp.eq.s32.totalorder %s33, 0
      %p158 = por %p156, %p157
      %s160 = sadd.s32 %s159, 1
      %p163 = scmp.eq.s32.totalorder %s27, 1
      %p164 = scmp.ne.s32.totalorder %s159, %s161
      %p165 = scmp.eq.s32.totalorder %s27, 0
      %p166 = por %p164, %p165
      %p167 = scmp.ne.s32.totalorder %s159, %s161
      %p168 = scmp.eq.s32.totalorder %s32, 1
      %p169 = por %p167, %p168
      %p170 = scmp.ne.s32.totalorder %s161, %s162
      %p171 = scmp.eq.s32.totalorder %s32, 0
      %p172 = por %p170, %p171
      %p173 = scmp.ne.s32.totalorder %s161, %s162
      %p174 = scmp.eq.s32.totalorder %s33, 1
      %p175 = por %p173, %p174
      %p177 = scmp.ne.s32.totalorder %s162, %s176
      %p178 = scmp.eq.s32.totalorder %s33, 0
      %p179 = por %p177, %p178
      %s181 = sadd.s32 %s180, 1
      %p184 = scmp.eq.s32.totalorder %s27, 1
      %p185 = scmp.ne.s32.totalorder %s180, %s182
      %p186 = scmp.eq.s32.totalorder %s27, 0
      %p187 = por %p185, %p186
      %p188 = scmp.ne.s32.totalorder %s180, %s182
      %p189 = scmp.eq.s32.totalorder %s32, 1
      %p190 = por %p188, %p189
      %p191 = scmp.ne.s32.totalorder %s182, %s183
      %p192 = scmp.eq.s32.totalorder %s32, 0
      %p193 = por %p191, %p192
      %p194 = scmp.ne.s32.totalorder %s182, %s183
      %p195 = scmp.eq.s32.totalorder %s33, 1
      %p196 = por %p194, %p195
      %p198 = scmp.ne.s32.totalorder %s183, %s197
      %p199 = scmp.eq.s32.totalorder %s33, 0
      %p200 = por %p198, %p199
      %s201 = ssub.s32 %s34, %s46
      %s202 = ssub.s32 %s35, %s42
      %s203 = sor.u32 %s201, %s202
      %p204 = scmp.eq.s32.totalorder %s203, 0
      %s206 = sadd.s32 %s205, 1
      %s207 = scalar_select %p204, %s205, %s206
      %p210 = pneg %p204
      %p211 = scmp.eq.s32.totalorder %s27, 1
      %p212 = por %p210, %p211
      %p213 = scmp.ne.s32.totalorder %s205, %s208
      %p214 = scmp.eq.s32.totalorder %s27, 0
      %p215 = por %p213, %p214
      %p216 = scmp.ne.s32.totalorder %s205, %s208
      %p217 = scmp.eq.s32.totalorder %s32, 1
      %p218 = por %p216, %p217
      %p219 = scmp.ne.s32.totalorder %s208, %s209
      %p220 = scmp.eq.s32.totalorder %s32, 0
      %p221 = por %p219, %p220
      %p222 = scmp.ne.s32.totalorder %s208, %s209
      %p223 = scmp.eq.s32.totalorder %s33, 1
      %p224 = por %p222, %p223
      %p226 = scmp.ne.s32.totalorder %s209, %s225
      %p227 = scmp.eq.s32.totalorder %s33, 0
      %p228 = por %p226, %p227
      %s229 = ssub.s32 %s34, %s46
      %s230 = ssub.s32 %s35, %s42
      %s231 = sor.u32 %s229, %s230
      %p232 = scmp.eq.s32.totalorder %s231, 0
      %s234 = sadd.s32 %s233, 1
      %s235 = scalar_select %p232, %s233, %s234
      %p238 = pneg %p232
      %p239 = scmp.eq.s32.totalorder %s27, 1
      %p240 = por %p238, %p239
      %p241 = scmp.ne.s32.totalorder %s233, %s236
      %p242 = scmp.eq.s32.totalorder %s27, 0
      %p243 = por %p241, %p242
      %p244 = scmp.ne.s32.totalorder %s233, %s236
      %p245 = scmp.eq.s32.totalorder %s32, 1
      %p246 = por %p244, %p245
      %p247 = scmp.ne.s32.totalorder %s236, %s237
      %p248 = scmp.eq.s32.totalorder %s32, 0
      %p249 = por %p247, %p248
      %p250 = scmp.ne.s32.totalorder %s236, %s237
      %p251 = scmp.eq.s32.totalorder %s33, 1
      %p252 = por %p250, %p251
      %p254 = scmp.ne.s32.totalorder %s237, %s253
      %p255 = scmp.eq.s32.totalorder %s33, 0
      %p256 = por %p254, %p255
      %s257 = ssub.s32 %s34, %s46
      %s258 = ssub.s32 %s35, %s42
      %s259 = sor.u32 %s257, %s258
      %p260 = scmp.eq.s32.totalorder %s259, 0
      %s262 = sadd.s32 %s261, 1
      %s263 = scalar_select %p260, %s261, %s262
      %p266 = pneg %p260
      %p267 = scmp.eq.s32.totalorder %s27, 1
      %p268 = por %p266, %p267
      %p269 = scmp.ne.s32.totalorder %s261, %s264
      %p270 = scmp.eq.s32.totalorder %s27, 0
      %p271 = por %p269, %p270
      %p272 = scmp.ne.s32.totalorder %s261, %s264
      %p273 = scmp.eq.s32.totalorder %s32, 1
      %p274 = por %p272, %p273
      %p275 = scmp.ne.s32.totalorder %s264, %s265
      %p276 = scmp.eq.s32.totalorder %s32, 0
      %p277 = por %p275, %p276
      %p278 = scmp.ne.s32.totalorder %s264, %s265
      %p279 = scmp.eq.s32.totalorder %s33, 1
      %p280 = por %p278, %p279
      %p282 = scmp.ne.s32.totalorder %s265, %s281
      %p283 = scmp.eq.s32.totalorder %s33, 0
      %p284 = por %p282, %p283
      %p285 = scmp.le.s32.totalorder 1, %s27
      %p286 = scmp.lt.s32.totalorder %s27, 3
      %p287 = pnand %p285, %p286
      %p288 = pneg %p287
      // Predicated region
      $region9: #{tpu_custom_call.1} parent=5 // pred_check
        _
      $region10: #{tpu_custom_call.1} parent=5 // pred_check_branch
        %290 = sbr.rel (%p287) target = $region12
      $region11: #{tpu_custom_call.1} parent=5 // pred_region
        %s291 = ssub.s32 %s27, 1
        // Predicated region
        $region13: #{tpu_custom_call.1} parent=11 // pred_check
          %p292 = pneg %p88
        $region14: #{tpu_custom_call.1} parent=11 // pred_check_branch
          %294 = sbr.rel (%p292) target = $region16
        $region15: #{tpu_custom_call.1} parent=11 // pred_region
          %s296 = ssub.s32 256, 256
          %297 = vsyncadd [#allocation6], %s296
          %s298 = sshll.u32 [#allocation5], 4
          %s299 = int_to_ptr.vmem [resolvable:$true] %s298
          %304 = dma.hbm_to_vmem [thread:$0]  %s1, 256, %s299, [#allocation6], 64, 64, 4
        $region16: #{tpu_custom_call.1} parent=11 // pred_fallthru
          _
        // Predicated region
        $region17: #{tpu_custom_call.1} parent=11 // pred_check
          %p305 = pneg %p109
        $region18: #{tpu_custom_call.1} parent=11 // pred_check_branch
          %307 = sbr.rel (%p305) target = $region20
        $region19: #{tpu_custom_call.1} parent=11 // pred_region
          _
        $region20: #{tpu_custom_call.1} parent=11 // pred_fallthru
          _
        // Predicated region
        $region21: #{tpu_custom_call.1} parent=11 // pred_check
          %p308 = pneg %p130
        $region22: #{tpu_custom_call.1} parent=11 // pred_check_branch
          %310 = sbr.rel (%p308) target = $region24
        $region23: #{tpu_custom_call.1} parent=11 // pred_region
          %s312 = ssub.s32 256, 256
          %313 = vsyncadd [#allocation6], %s312
          %s314 = sshll.u32 [#allocation7], 4
          %s315 = int_to_ptr.vmem [resolvable:$true] %s314
          %320 = dma.hbm_to_vmem [thread:$0]  %s3, 256, %s315, [#allocation6], 64, 64, 4
        $region24: #{tpu_custom_call.1} parent=11 // pred_fallthru
          _
        // Predicated region
        $region25: #{tpu_custom_call.1} parent=11 // pred_check
          %p321 = pneg %p151
        $region26: #{tpu_custom_call.1} parent=11 // pred_check_branch
          %323 = sbr.rel (%p321) target = $region28
        $region27: #{tpu_custom_call.1} parent=11 // pred_region
          _
        $region28: #{tpu_custom_call.1} parent=11 // pred_fallthru
          _
        // Predicated region
        $region29: #{tpu_custom_call.1} parent=11 // pred_check
          %p324 = pneg %p172
        $region30: #{tpu_custom_call.1} parent=11 // pred_check_branch
          %326 = sbr.rel (%p324) target = $region32
        $region31: #{tpu_custom_call.1} parent=11 // pred_region
          %s328 = ssub.s32 256, 256
          %329 = vsyncadd [#allocation9], %s328
          %s330 = sshll.u32 [#allocation8], 4
          %s331 = int_to_ptr.vmem [resolvable:$true] %s330
          %336 = dma.hbm_to_vmem [thread:$0]  %s5, 256, %s331, [#allocation9], 64, 64, 4
        $region32: #{tpu_custom_call.1} parent=11 // pred_fallthru
          _
        // Predicated region
        $region33: #{tpu_custom_call.1} parent=11 // pred_check
          %p337 = pneg %p193
        $region34: #{tpu_custom_call.1} parent=11 // pred_check_branch
          %339 = sbr.rel (%p337) target = $region36
        $region35: #{tpu_custom_call.1} parent=11 // pred_region
          _
        $region36: #{tpu_custom_call.1} parent=11 // pred_fallthru
          _
      $region12: #{tpu_custom_call.1} parent=5 // pred_fallthru
        _
      %p340 = scmp.lt.s32.totalorder %s27, 2
      // Predicated region
      $region37: #{tpu_custom_call.1} parent=5 // pred_check
        %p341 = pneg %p340
      $region38: #{tpu_custom_call.1} parent=5 // pred_check_branch
        %343 = sbr.rel (%p341) target = $region40
      $region39: #{tpu_custom_call.1} parent=5 // pred_region
        // Predicated region
        $region41: #{tpu_custom_call.1} parent=39 // pred_check
          %p344 = pneg %p61
        $region42: #{tpu_custom_call.1} parent=39 // pred_check_branch
          %346 = sbr.rel (%p344) target = $region44
        $region43: #{tpu_custom_call.1} parent=39 // pred_region
          %s347 = sand.u32 %s51, 1
          %s348 = scalar_lea.sflag [#allocation3], %s347
          %s349 = sand.u32 %s51, 1
          %s350 = smul.addr %s349, 8
          %s351 = scalar_lea.vmem [#allocation2], %s350
          %s353 = ssub.s32 128, 128
          %354 = vsyncadd %s348, %s353
          %s355 = sadd.s32 %s35, %s34
          %s356 = smul.addr %s355, 128
          %s357 = scalar_lea.hbm %s0, %s356
          %s359 = sshll.u32 %s351, 4
          %s360 = int_to_ptr.vmem [resolvable:$true] %s359
          %362 = dma.hbm_to_vmem [thread:$0]  %s357, 128, %s360, %s348
        $region44: #{tpu_custom_call.1} parent=39 // pred_fallthru
          _
      $region40: #{tpu_custom_call.1} parent=5 // pred_fallthru
        _
      %p363 = scmp.le.s32.totalorder 1, %s27
      %p364 = scmp.lt.s32.totalorder %s27, 3
      %p365 = pnand %p363, %p364
      %p366 = pneg %p365
      // Predicated region
      $region45: #{tpu_custom_call.1} parent=5 // pred_check
        _
      $region46: #{tpu_custom_call.1} parent=5 // pred_check_branch
        %368 = sbr.rel (%p365) target = $region48
      $region47: #{tpu_custom_call.1} parent=5 // pred_region
        %s369 = ssub.s32 %s27, 1
        %s370 = sand.u32 %s54, 1
        %s371 = scalar_lea.sflag [#allocation3], %s370
        %s372 = sand.u32 %s54, 1
        %s373 = smul.addr %s372, 8
        %s374 = scalar_lea.vmem [#allocation2], %s373
        // Predicated region
        $region49: #{tpu_custom_call.1} parent=47 // pred_check
          %p375 = pneg %p67
        $region50: #{tpu_custom_call.1} parent=47 // pred_check_branch
          %377 = sbr.rel (%p375) target = $region52
        $region51: #{tpu_custom_call.1} parent=47 // pred_region
          %378 = dma.done %s371, 128
        $region52: #{tpu_custom_call.1} parent=47 // pred_fallthru
          _
        // Predicated region
        $region53: #{tpu_custom_call.1} parent=47 // pred_check
          %p379 = pneg %p88
        $region54: #{tpu_custom_call.1} parent=47 // pred_check_branch
          %381 = sbr.rel (%p379) target = $region56
        $region55: #{tpu_custom_call.1} parent=47 // pred_region
          %382 = dma.done [#allocation6], 256
        $region56: #{tpu_custom_call.1} parent=47 // pred_fallthru
          _
        // Predicated region
        $region57: #{tpu_custom_call.1} parent=47 // pred_check
          %p383 = pneg %p130
        $region58: #{tpu_custom_call.1} parent=47 // pred_check_branch
          %385 = sbr.rel (%p383) target = $region60
        $region59: #{tpu_custom_call.1} parent=47 // pred_region
          %386 = dma.done [#allocation6], 256
        $region60: #{tpu_custom_call.1} parent=47 // pred_fallthru
          _
        // Predicated region
        $region61: #{tpu_custom_call.1} parent=47 // pred_check
          %p387 = pneg %p172
        $region62: #{tpu_custom_call.1} parent=47 // pred_check_branch
          %389 = sbr.rel (%p387) target = $region64
        $region63: #{tpu_custom_call.1} parent=47 // pred_region
          %390 = dma.done [#allocation9], 256
        $region64: #{tpu_custom_call.1} parent=47 // pred_fallthru
          _
        %s391 = sand.u32 %s54, 1
        %s392 = scalar_lea.sflag [#allocation3], %s391
        %s393 = sand.u32 %s54, 1
        %s394 = smul.addr %s393, 8
        %s395 = scalar_lea.vmem [#allocation2], %s394
        %p396 = pneg %p67
        %p397 = pneg %p64
        %p398 = pneg %p88
        %p399 = pneg %p85
        %p400 = pneg %p109
        %p401 = pneg %p106
        %p402 = pneg %p130
        %p403 = pneg %p127
        %p404 = pneg %p151
        %p405 = pneg %p148
        %p406 = pneg %p172
        %p407 = pneg %p169
        %p408 = pneg %p193
        %p409 = pneg %p190
        %p410 = pneg %p221
        %p411 = pneg %p218
        %s412 = sand.u32 %s208, 1
        %s413 = scalar_lea.sflag [#allocation4], %s412
        %s414 = sand.u32 %s208, 1
        %s415 = smul.addr %s414, 16
        %s416 = scalar_lea.vmem [#allocation10], %s415
        %p417 = pneg %p249
        %p418 = pneg %p246
        %s419 = sand.u32 %s32, 1
        %s420 = scalar_lea.sflag [#allocation12], %s419
        %s421 = sand.u32 %s236, 1
        %s422 = smul.addr %s421, 16
        %s423 = scalar_lea.vmem [#allocation11], %s422
        %p424 = pneg %p277
        %p425 = pneg %p274
        %s426 = sand.u32 %s32, 1
        %s427 = scalar_lea.sflag [#allocation12], %s426
        %s428 = sand.u32 %s264, 1
        %s429 = smul.addr %s428, 16
        %s430 = scalar_lea.vmem [#allocation13], %s429
        %v432 = vld [vmem:[%s374] sm:$0xff]
        %v433 = vpack.c.bf16 %v432, %v432
        %v434 = vld [vmem:[#allocation5] sm:$0xf]
        %v435 = vld [vmem:[#allocation5 + $0x4] sm:$0xf]
        %v436 = vld [vmem:[#allocation5 + $0x8] sm:$0xf]
        %v437 = vld [vmem:[#allocation5 + $0xc] sm:$0xf]
        %v438 = vld [vmem:[%s2] sm:$0x1]
        %v440 = vlaneseq
        %v441 = vshrl.u32 %v440, 7
        %v442 = vsub.s32 0, %v441
        %v443 = vrot.slane %v438, %v442
        %v449 = vunpack.c.l.b16 %v434
        %v450 = vunpack.c.l.b16 %v435
        %v451 = vunpack.c.l.b16 %v436
        %v452 = vunpack.c.l.b16 %v437
        %v453 = vpack.c.b16 %v450, %v449
        %v454 = vpack.c.b16 %v452, %v451
        %vm457 = vcmask 261120
        %v459 = vsel %vm457, %v433, 0
        %461 = vmatprep.subr.bf16.mxu0 0
        %462 = vmatpush1.bf16.msra.mxu0 0
        %463 = vmatprep.subr.bf16.mxu0 0
        %464 = vmatpush1.bf16.msra.mxu0 0
        %465 = vmatprep.subr.bf16.mxu0 0
        %466 = vmatpush1.bf16.msra.mxu0 0
        %467 = vmatprep.subr.bf16.mxu0 0
        %468 = vmatpush1.bf16.msra.mxu0 0
        %469 = vmatprep.subr.bf16.mxu0 0
        %470 = vmatpush1.bf16.msra.mxu0 0
        %471 = vmatprep.subr.bf16.mxu0 0
        %472 = vmatpush1.bf16.msra.mxu0 0
        %473 = vmatprep.subr.bf16.mxu0 0
        %474 = vmatpush1.bf16.msra.mxu0 %v454
        %475 = vmatprep.subr.bf16.mxu0 0
        %476 = vmatpush1.bf16.msra.mxu0 %v453
        %477 = vmatprep.subr.bf16.mxu0 0
        %478 = vmatpush2.bf16.msra.mxu0 0
        %479 = vmatprep.subr.bf16.mxu0 0
        %480 = vmatpush2.bf16.msra.mxu0 0
        %481 = vmatprep.subr.bf16.mxu0 0
        %482 = vmatpush2.bf16.msra.mxu0 0
        %483 = vmatprep.subr.bf16.mxu0 0
        %484 = vmatpush2.bf16.msra.mxu0 0
        %485 = vmatprep.subr.bf16.mxu0 0
        %486 = vmatpush2.bf16.msra.mxu0 0
        %487 = vmatprep.subr.bf16.mxu0 0
        %488 = vmatpush2.bf16.msra.mxu0 0
        %489 = vmatprep.subr.bf16.mxu0 0
        %490 = vmatpush2.bf16.msra.mxu0 0
        %491 = vmatprep.subr.bf16.mxu0 0
        %492 = vmatpush2.bf16.msra.mxu0 0
        %493 = vmatprep.mubr.bf16.mxu0 0
        %494 = vmatmul.mubr.bf16.gmra.mxu0 %v459
        %v495 = vpop.f32.mrf.mxu0
        %v496 = vadd.f32 %v443, %v495
        %v497 = vpop.f32.mrf.mxu0
        %v498 = vpop.f32.mrf.mxu0
        %v499 = vpop.f32.mrf.mxu0
        %500 = vdwg.mxu0
        %v501 = vpack.c.bf16 %v496, %v496
        %503 = vrot.lane.b32.xlu0 %v501, 120
        %v504 = vpop.permute.xlu0 %503
        %505 = vrot.lane.b32.xlu0 %v501, 112
        %v506 = vpop.permute.xlu0 %505
        %507 = vrot.lane.b32.xlu0 %v501, 104
        %v508 = vpop.permute.xlu0 %507
        %v510 = vunpack.c.l.s4 1983009808
        %v511 = vunpack.c.0.s8 %v510
        %v512 = vlaneseq
        %v513 = vshrl.u32 %v512, 7
        %v514 = vsub.s32 %v511, %v513
        %v515 = vrot.slane %v501, %v514
        %v518 = vunpack.c.l.s4 1983009808
        %v519 = vunpack.c.0.s8 %v518
        %v520 = vlaneseq
        %v521 = vshrl.u32 %v520, 7
        %v522 = vsub.s32 %v519, %v521
        %v523 = vrot.slane %v506, %v522
        %v524 = vcombine.low %v515, %v523
        %v525 = vcombine.high %v515, %v523
        %v527 = vunpack.c.l.s4 1934713408
        %v528 = vunpack.c.0.s8 %v527
        %v529 = vlaneseq
        %v530 = vshrl.u32 %v529, 7
        %v531 = vsub.s32 %v528, %v530
        %v532 = vrot.slane %v524, %v531
        %v534 = vunpack.c.l.s4 1934713408
        %v535 = vunpack.c.0.s8 %v534
        %v536 = vlaneseq
        %v537 = vshrl.u32 %v536, 7
        %v538 = vsub.s32 %v535, %v537
        %v539 = vrot.slane %v525, %v538
        %v540 = vcombine.high %v532, 0
        %v541 = vcombine.high %v539, 0
        %v544 = vunpack.c.l.s4 1983009808
        %v545 = vunpack.c.0.s8 %v544
        %v546 = vlaneseq
        %v547 = vshrl.u32 %v546, 7
        %v548 = vsub.s32 %v545, %v547
        %v549 = vrot.slane %v504, %v548
        %v552 = vunpack.c.l.s4 1983009808
        %v553 = vunpack.c.0.s8 %v552
        %v554 = vlaneseq
        %v555 = vshrl.u32 %v554, 7
        %v556 = vsub.s32 %v553, %v555
        %v557 = vrot.slane %v508, %v556
        %v558 = vcombine.low %v549, %v557
        %v559 = vcombine.high %v549, %v557
        %v561 = vunpack.c.l.s4 1934713408
        %v562 = vunpack.c.0.s8 %v561
        %v563 = vlaneseq
        %v564 = vshrl.u32 %v563, 7
        %v565 = vsub.s32 %v562, %v564
        %v566 = vrot.slane %v558, %v565
        %v568 = vunpack.c.l.s4 1934713408
        %v569 = vunpack.c.0.s8 %v568
        %v570 = vlaneseq
        %v571 = vshrl.u32 %v570, 7
        %v572 = vsub.s32 %v569, %v571
        %v573 = vrot.slane %v559, %v572
        %v574 = vcombine.high %v566, 0
        %v575 = vcombine.high %v573, 0
        %v578 = vpack.i.b16 %v566, %v532
        %v580 = vshrl.u32 %v532, 16
        %v581 = vshrl.u32 %v566, 16
        %v582 = vpack.i.b16 %v581, %v580
        %v586 = vpack.i.b16 %v574, %v540
        %v588 = vshrl.u32 %v540, 16
        %v589 = vshrl.u32 %v574, 16
        %v590 = vpack.i.b16 %v589, %v588
        %v594 = vpack.i.b16 %v573, %v539
        %v596 = vshrl.u32 %v539, 16
        %v597 = vshrl.u32 %v573, 16
        %v598 = vpack.i.b16 %v597, %v596
        %v602 = vpack.i.b16 %v575, %v541
        %v604 = vshrl.u32 %v541, 16
        %v605 = vshrl.u32 %v575, 16
        %v606 = vpack.i.b16 %v605, %v604
        %v608 = vcombine.low %v578, %v594
        %v610 = vunpack.c.l.s4 1983009808
        %v611 = vunpack.c.0.s8 %v610
        %v612 = vlaneseq
        %v613 = vshrl.u32 %v612, 7
        %v614 = vsub.s32 %v611, %v613
        %v615 = vrot.slane %v608, %v614
        %v616 = vcombine.low %v586, %v602
        %v618 = vunpack.c.l.s4 1983009808
        %v619 = vunpack.c.0.s8 %v618
        %v620 = vlaneseq
        %v621 = vshrl.u32 %v620, 7
        %v622 = vsub.s32 %v619, %v621
        %v623 = vrot.slane %v616, %v622
        %v624 = vcombine.low %v615, %v623
        %v626 = vunpack.c.l.s4 1934713408
        %v627 = vunpack.c.0.s8 %v626
        %v628 = vlaneseq
        %v629 = vshrl.u32 %v628, 7
        %v630 = vsub.s32 %v627, %v629
        %v631 = vrot.slane %v624, %v630
        %v632 = vcombine.high %v631, 0
        %v633 = vcombine.low %v582, %v598
        %v635 = vunpack.c.l.s4 1983009808
        %v636 = vunpack.c.0.s8 %v635
        %v637 = vlaneseq
        %v638 = vshrl.u32 %v637, 7
        %v639 = vsub.s32 %v636, %v638
        %v640 = vrot.slane %v633, %v639
        %v641 = vcombine.low %v590, %v606
        %v643 = vunpack.c.l.s4 1983009808
        %v644 = vunpack.c.0.s8 %v643
        %v645 = vlaneseq
        %v646 = vshrl.u32 %v645, 7
        %v647 = vsub.s32 %v644, %v646
        %v648 = vrot.slane %v641, %v647
        %v649 = vcombine.low %v640, %v648
        %v651 = vunpack.c.l.s4 1934713408
        %v652 = vunpack.c.0.s8 %v651
        %v653 = vlaneseq
        %v654 = vshrl.u32 %v653, 7
        %v655 = vsub.s32 %v652, %v654
        %v656 = vrot.slane %v649, %v655
        %v657 = vcombine.high %v656, 0
        %v660 = vpack.i.b16 %v656, %v631
        %v662 = vshrl.u32 %v631, 16
        %v663 = vshrl.u32 %v656, 16
        %v664 = vpack.i.b16 %v663, %v662
        %v668 = vpack.i.b16 %v657, %v632
        %v670 = vshrl.u32 %v632, 16
        %v671 = vshrl.u32 %v657, 16
        %v672 = vpack.i.b16 %v671, %v670
        %vm674 = vcmask 60416
        %675 = vst.msk [vmem:[%s416] sm:$0xf] %vm674, %v660
        %676 = vst.msk [vmem:[%s416 + $0x4] sm:$0xf] %vm674, %v664
        %677 = vst.msk [vmem:[%s416 + $0x8] sm:$0xf] %vm674, %v668
        %678 = vst.msk [vmem:[%s416 + $0xc] sm:$0xf] %vm674, %v672
        %v679 = vld [vmem:[#allocation7] sm:$0xf]
        %v680 = vld [vmem:[#allocation7 + $0x4] sm:$0xf]
        %v681 = vld [vmem:[#allocation7 + $0x8] sm:$0xf]
        %v682 = vld [vmem:[#allocation7 + $0xc] sm:$0xf]
        %v683 = vld [vmem:[%s4] sm:$0x1]
        %v685 = vlaneseq
        %v686 = vshrl.u32 %v685, 7
        %v687 = vsub.s32 0, %v686
        %v688 = vrot.slane %v683, %v687
        %v694 = vunpack.c.l.b16 %v679
        %v695 = vunpack.c.l.b16 %v680
        %v696 = vunpack.c.l.b16 %v681
        %v697 = vunpack.c.l.b16 %v682
        %v698 = vpack.c.b16 %v695, %v694
        %v699 = vpack.c.b16 %v697, %v696
        %702 = vmatprep.subr.bf16.mxu0 0
        %703 = vmatpush1.bf16.msra.mxu0 0
        %704 = vmatprep.subr.bf16.mxu0 0
        %705 = vmatpush1.bf16.msra.mxu0 0
        %706 = vmatprep.subr.bf16.mxu0 0
        %707 = vmatpush1.bf16.msra.mxu0 0
        %708 = vmatprep.subr.bf16.mxu0 0
        %709 = vmatpush1.bf16.msra.mxu0 0
        %710 = vmatprep.subr.bf16.mxu0 0
        %711 = vmatpush1.bf16.msra.mxu0 0
        %712 = vmatprep.subr.bf16.mxu0 0
        %713 = vmatpush1.bf16.msra.mxu0 0
        %714 = vmatprep.subr.bf16.mxu0 0
        %715 = vmatpush1.bf16.msra.mxu0 %v699
        %716 = vmatprep.subr.bf16.mxu0 0
        %717 = vmatpush1.bf16.msra.mxu0 %v698
        %718 = vmatprep.subr.bf16.mxu0 0
        %719 = vmatpush2.bf16.msra.mxu0 0
        %720 = vmatprep.subr.bf16.mxu0 0
        %721 = vmatpush2.bf16.msra.mxu0 0
        %722 = vmatprep.subr.bf16.mxu0 0
        %723 = vmatpush2.bf16.msra.mxu0 0
        %724 = vmatprep.subr.bf16.mxu0 0
        %725 = vmatpush2.bf16.msra.mxu0 0
        %726 = vmatprep.subr.bf16.mxu0 0
        %727 = vmatpush2.bf16.msra.mxu0 0
        %728 = vmatprep.subr.bf16.mxu0 0
        %729 = vmatpush2.bf16.msra.mxu0 0
        %730 = vmatprep.subr.bf16.mxu0 0
        %731 = vmatpush2.bf16.msra.mxu0 0
        %732 = vmatprep.subr.bf16.mxu0 0
        %733 = vmatpush2.bf16.msra.mxu0 0
        %734 = vmatprep.mubr.bf16.mxu0 0
        %735 = vmatmul.mubr.bf16.gmra.mxu0 %v459
        %v736 = vpop.f32.mrf.mxu0
        %v737 = vadd.f32 %v688, %v736
        %v738 = vpop.f32.mrf.mxu0
        %v739 = vpop.f32.mrf.mxu0
        %v740 = vpop.f32.mrf.mxu0
        %741 = vdwg.mxu0
        %v742 = vpack.c.bf16 %v737, %v737
        %744 = vrot.lane.b32.xlu0 %v742, 120
        %v745 = vpop.permute.xlu0 %744
        %746 = vrot.lane.b32.xlu0 %v742, 112
        %v747 = vpop.permute.xlu0 %746
        %748 = vrot.lane.b32.xlu0 %v742, 104
        %v749 = vpop.permute.xlu0 %748
        %v751 = vunpack.c.l.s4 1983009808
        %v752 = vunpack.c.0.s8 %v751
        %v753 = vlaneseq
        %v754 = vshrl.u32 %v753, 7
        %v755 = vsub.s32 %v752, %v754
        %v756 = vrot.slane %v742, %v755
        %v759 = vunpack.c.l.s4 1983009808
        %v760 = vunpack.c.0.s8 %v759
        %v761 = vlaneseq
        %v762 = vshrl.u32 %v761, 7
        %v763 = vsub.s32 %v760, %v762
        %v764 = vrot.slane %v747, %v763
        %v765 = vcombine.low %v756, %v764
        %v766 = vcombine.high %v756, %v764
        %v768 = vunpack.c.l.s4 1934713408
        %v769 = vunpack.c.0.s8 %v768
        %v770 = vlaneseq
        %v771 = vshrl.u32 %v770, 7
        %v772 = vsub.s32 %v769, %v771
        %v773 = vrot.slane %v765, %v772
        %v775 = vunpack.c.l.s4 1934713408
        %v776 = vunpack.c.0.s8 %v775
        %v777 = vlaneseq
        %v778 = vshrl.u32 %v777, 7
        %v779 = vsub.s32 %v776, %v778
        %v780 = vrot.slane %v766, %v779
        %v781 = vcombine.high %v773, 0
        %v782 = vcombine.high %v780, 0
        %v785 = vunpack.c.l.s4 1983009808
        %v786 = vunpack.c.0.s8 %v785
        %v787 = vlaneseq
        %v788 = vshrl.u32 %v787, 7
        %v789 = vsub.s32 %v786, %v788
        %v790 = vrot.slane %v745, %v789
        %v793 = vunpack.c.l.s4 1983009808
        %v794 = vunpack.c.0.s8 %v793
        %v795 = vlaneseq
        %v796 = vshrl.u32 %v795, 7
        %v797 = vsub.s32 %v794, %v796
        %v798 = vrot.slane %v749, %v797
        %v799 = vcombine.low %v790, %v798
        %v800 = vcombine.high %v790, %v798
        %v802 = vunpack.c.l.s4 1934713408
        %v803 = vunpack.c.0.s8 %v802
        %v804 = vlaneseq
        %v805 = vshrl.u32 %v804, 7
        %v806 = vsub.s32 %v803, %v805
        %v807 = vrot.slane %v799, %v806
        %v809 = vunpack.c.l.s4 1934713408
        %v810 = vunpack.c.0.s8 %v809
        %v811 = vlaneseq
        %v812 = vshrl.u32 %v811, 7
        %v813 = vsub.s32 %v810, %v812
        %v814 = vrot.slane %v800, %v813
        %v815 = vcombine.high %v807, 0
        %v816 = vcombine.high %v814, 0
        %v819 = vpack.i.b16 %v807, %v773
        %v821 = vshrl.u32 %v773, 16
        %v822 = vshrl.u32 %v807, 16
        %v823 = vpack.i.b16 %v822, %v821
        %v827 = vpack.i.b16 %v815, %v781
        %v829 = vshrl.u32 %v781, 16
        %v830 = vshrl.u32 %v815, 16
        %v831 = vpack.i.b16 %v830, %v829
        %v835 = vpack.i.b16 %v814, %v780
        %v837 = vshrl.u32 %v780, 16
        %v838 = vshrl.u32 %v814, 16
        %v839 = vpack.i.b16 %v838, %v837
        %v843 = vpack.i.b16 %v816, %v782
        %v845 = vshrl.u32 %v782, 16
        %v846 = vshrl.u32 %v816, 16
        %v847 = vpack.i.b16 %v846, %v845
        %v849 = vcombine.low %v819, %v835
        %v851 = vunpack.c.l.s4 1983009808
        %v852 = vunpack.c.0.s8 %v851
        %v853 = vlaneseq
        %v854 = vshrl.u32 %v853, 7
        %v855 = vsub.s32 %v852, %v854
        %v856 = vrot.slane %v849, %v855
        %v857 = vcombine.low %v827, %v843
        %v859 = vunpack.c.l.s4 1983009808
        %v860 = vunpack.c.0.s8 %v859
        %v861 = vlaneseq
        %v862 = vshrl.u32 %v861, 7
        %v863 = vsub.s32 %v860, %v862
        %v864 = vrot.slane %v857, %v863
        %v865 = vcombine.low %v856, %v864
        %v867 = vunpack.c.l.s4 1934713408
        %v868 = vunpack.c.0.s8 %v867
        %v869 = vlaneseq
        %v870 = vshrl.u32 %v869, 7
        %v871 = vsub.s32 %v868, %v870
        %v872 = vrot.slane %v865, %v871
        %v873 = vcombine.high %v872, 0
        %v874 = vcombine.low %v823, %v839
        %v876 = vunpack.c.l.s4 1983009808
        %v877 = vunpack.c.0.s8 %v876
        %v878 = vlaneseq
        %v879 = vshrl.u32 %v878, 7
        %v880 = vsub.s32 %v877, %v879
        %v881 = vrot.slane %v874, %v880
        %v882 = vcombine.low %v831, %v847
        %v884 = vunpack.c.l.s4 1983009808
        %v885 = vunpack.c.0.s8 %v884
        %v886 = vlaneseq
        %v887 = vshrl.u32 %v886, 7
        %v888 = vsub.s32 %v885, %v887
        %v889 = vrot.slane %v882, %v888
        %v890 = vcombine.low %v881, %v889
        %v892 = vunpack.c.l.s4 1934713408
        %v893 = vunpack.c.0.s8 %v892
        %v894 = vlaneseq
        %v895 = vshrl.u32 %v894, 7
        %v896 = vsub.s32 %v893, %v895
        %v897 = vrot.slane %v890, %v896
        %v898 = vcombine.high %v897, 0
        %v901 = vpack.i.b16 %v897, %v872
        %v903 = vshrl.u32 %v872, 16
        %v904 = vshrl.u32 %v897, 16
        %v905 = vpack.i.b16 %v904, %v903
        %v909 = vpack.i.b16 %v898, %v873
        %v911 = vshrl.u32 %v873, 16
        %v912 = vshrl.u32 %v898, 16
        %v913 = vpack.i.b16 %v912, %v911
        %915 = vst.msk [vmem:[%s423] sm:$0xf] %vm674, %v901
        %916 = vst.msk [vmem:[%s423 + $0x4] sm:$0xf] %vm674, %v905
        %917 = vst.msk [vmem:[%s423 + $0x8] sm:$0xf] %vm674, %v909
        %918 = vst.msk [vmem:[%s423 + $0xc] sm:$0xf] %vm674, %v913
        %v919 = vld [vmem:[#allocation8] sm:$0xf]
        %v920 = vld [vmem:[#allocation8 + $0x4] sm:$0xf]
        %v921 = vld [vmem:[#allocation8 + $0x8] sm:$0xf]
        %v922 = vld [vmem:[#allocation8 + $0xc] sm:$0xf]
        %v923 = vld [vmem:[%s6] sm:$0x1]
        %v925 = vlaneseq
        %v926 = vshrl.u32 %v925, 7
        %v927 = vsub.s32 0, %v926
        %v928 = vrot.slane %v923, %v927
        %v934 = vunpack.c.l.b16 %v919
        %v935 = vunpack.c.l.b16 %v920
        %v936 = vunpack.c.l.b16 %v921
        %v937 = vunpack.c.l.b16 %v922
        %v938 = vpack.c.b16 %v935, %v934
        %v939 = vpack.c.b16 %v937, %v936
        %942 = vmatprep.subr.bf16.mxu0 0
        %943 = vmatpush1.bf16.msra.mxu0 0
        %944 = vmatprep.subr.bf16.mxu0 0
        %945 = vmatpush1.bf16.msra.mxu0 0
        %946 = vmatprep.subr.bf16.mxu0 0
        %947 = vmatpush1.bf16.msra.mxu0 0
        %948 = vmatprep.subr.bf16.mxu0 0
        %949 = vmatpush1.bf16.msra.mxu0 0
        %950 = vmatprep.subr.bf16.mxu0 0
        %951 = vmatpush1.bf16.msra.mxu0 0
        %952 = vmatprep.subr.bf16.mxu0 0
        %953 = vmatpush1.bf16.msra.mxu0 0
        %954 = vmatprep.subr.bf16.mxu0 0
        %955 = vmatpush1.bf16.msra.mxu0 %v939
        %956 = vmatprep.subr.bf16.mxu0 0
        %957 = vmatpush1.bf16.msra.mxu0 %v938
        %958 = vmatprep.subr.bf16.mxu0 0
        %959 = vmatpush2.bf16.msra.mxu0 0
        %960 = vmatprep.subr.bf16.mxu0 0
        %961 = vmatpush2.bf16.msra.mxu0 0
        %962 = vmatprep.subr.bf16.mxu0 0
        %963 = vmatpush2.bf16.msra.mxu0 0
        %964 = vmatprep.subr.bf16.mxu0 0
        %965 = vmatpush2.bf16.msra.mxu0 0
        %966 = vmatprep.subr.bf16.mxu0 0
        %967 = vmatpush2.bf16.msra.mxu0 0
        %968 = vmatprep.subr.bf16.mxu0 0
        %969 = vmatpush2.bf16.msra.mxu0 0
        %970 = vmatprep.subr.bf16.mxu0 0
        %971 = vmatpush2.bf16.msra.mxu0 0
        %972 = vmatprep.subr.bf16.mxu0 0
        %973 = vmatpush2.bf16.msra.mxu0 0
        %974 = vmatprep.mubr.bf16.mxu0 0
        %975 = vmatmul.mubr.bf16.gmra.mxu0 %v459
        %v976 = vpop.f32.mrf.mxu0
        %v977 = vadd.f32 %v928, %v976
        %v978 = vpop.f32.mrf.mxu0
        %v979 = vpop.f32.mrf.mxu0
        %v980 = vpop.f32.mrf.mxu0
        %981 = vdwg.mxu0
        %v982 = vpack.c.bf16 %v977, %v977
        %984 = vrot.lane.b32.xlu0 %v982, 120
        %v985 = vpop.permute.xlu0 %984
        %986 = vrot.lane.b32.xlu0 %v982, 112
        %v987 = vpop.permute.xlu0 %986
        %988 = vrot.lane.b32.xlu0 %v982, 104
        %v989 = vpop.permute.xlu0 %988
        %v991 = vunpack.c.l.s4 1983009808
        %v992 = vunpack.c.0.s8 %v991
        %v993 = vlaneseq
        %v994 = vshrl.u32 %v993, 7
        %v995 = vsub.s32 %v992, %v994
        %v996 = vrot.slane %v982, %v995
        %v999 = vunpack.c.l.s4 1983009808
        %v1000 = vunpack.c.0.s8 %v999
        %v1001 = vlaneseq
        %v1002 = vshrl.u32 %v1001, 7
        %v1003 = vsub.s32 %v1000, %v1002
        %v1004 = vrot.slane %v987, %v1003
        %v1005 = vcombine.low %v996, %v1004
        %v1006 = vcombine.high %v996, %v1004
        %v1008 = vunpack.c.l.s4 1934713408
        %v1009 = vunpack.c.0.s8 %v1008
        %v1010 = vlaneseq
        %v1011 = vshrl.u32 %v1010, 7
        %v1012 = vsub.s32 %v1009, %v1011
        %v1013 = vrot.slane %v1005, %v1012
        %v1015 = vunpack.c.l.s4 1934713408
        %v1016 = vunpack.c.0.s8 %v1015
        %v1017 = vlaneseq
        %v1018 = vshrl.u32 %v1017, 7
        %v1019 = vsub.s32 %v1016, %v1018
        %v1020 = vrot.slane %v1006, %v1019
        %v1021 = vcombine.high %v1013, 0
        %v1022 = vcombine.high %v1020, 0
        %v1025 = vunpack.c.l.s4 1983009808
        %v1026 = vunpack.c.0.s8 %v1025
        %v1027 = vlaneseq
        %v1028 = vshrl.u32 %v1027, 7
        %v1029 = vsub.s32 %v1026, %v1028
        %v1030 = vrot.slane %v985, %v1029
        %v1033 = vunpack.c.l.s4 1983009808
        %v1034 = vunpack.c.0.s8 %v1033
        %v1035 = vlaneseq
        %v1036 = vshrl.u32 %v1035, 7
        %v1037 = vsub.s32 %v1034, %v1036
        %v1038 = vrot.slane %v989, %v1037
        %v1039 = vcombine.low %v1030, %v1038
        %v1040 = vcombine.high %v1030, %v1038
        %v1042 = vunpack.c.l.s4 1934713408
        %v1043 = vunpack.c.0.s8 %v1042
        %v1044 = vlaneseq
        %v1045 = vshrl.u32 %v1044, 7
        %v1046 = vsub.s32 %v1043, %v1045
        %v1047 = vrot.slane %v1039, %v1046
        %v1049 = vunpack.c.l.s4 1934713408
        %v1050 = vunpack.c.0.s8 %v1049
        %v1051 = vlaneseq
        %v1052 = vshrl.u32 %v1051, 7
        %v1053 = vsub.s32 %v1050, %v1052
        %v1054 = vrot.slane %v1040, %v1053
        %v1055 = vcombine.high %v1047, 0
        %v1056 = vcombine.high %v1054, 0
        %v1059 = vpack.i.b16 %v1047, %v1013
        %v1061 = vshrl.u32 %v1013, 16
        %v1062 = vshrl.u32 %v1047, 16
        %v1063 = vpack.i.b16 %v1062, %v1061
        %v1067 = vpack.i.b16 %v1055, %v1021
        %v1069 = vshrl.u32 %v1021, 16
        %v1070 = vshrl.u32 %v1055, 16
        %v1071 = vpack.i.b16 %v1070, %v1069
        %v1075 = vpack.i.b16 %v1054, %v1020
        %v1077 = vshrl.u32 %v1020, 16
        %v1078 = vshrl.u32 %v1054, 16
        %v1079 = vpack.i.b16 %v1078, %v1077
        %v1083 = vpack.i.b16 %v1056, %v1022
        %v1085 = vshrl.u32 %v1022, 16
        %v1086 = vshrl.u32 %v1056, 16
        %v1087 = vpack.i.b16 %v1086, %v1085
        %v1089 = vcombine.low %v1059, %v1075
        %v1091 = vunpack.c.l.s4 1983009808
        %v1092 = vunpack.c.0.s8 %v1091
        %v1093 = vlaneseq
        %v1094 = vshrl.u32 %v1093, 7
        %v1095 = vsub.s32 %v1092, %v1094
        %v1096 = vrot.slane %v1089, %v1095
        %v1097 = vcombine.low %v1067, %v1083
        %v1099 = vunpack.c.l.s4 1983009808
        %v1100 = vunpack.c.0.s8 %v1099
        %v1101 = vlaneseq
        %v1102 = vshrl.u32 %v1101, 7
        %v1103 = vsub.s32 %v1100, %v1102
        %v1104 = vrot.slane %v1097, %v1103
        %v1105 = vcombine.low %v1096, %v1104
        %v1107 = vunpack.c.l.s4 1934713408
        %v1108 = vunpack.c.0.s8 %v1107
        %v1109 = vlaneseq
        %v1110 = vshrl.u32 %v1109, 7
        %v1111 = vsub.s32 %v1108, %v1110
        %v1112 = vrot.slane %v1105, %v1111
        %v1113 = vcombine.high %v1112, 0
        %v1114 = vcombine.low %v1063, %v1079
        %v1116 = vunpack.c.l.s4 1983009808
        %v1117 = vunpack.c.0.s8 %v1116
        %v1118 = vlaneseq
        %v1119 = vshrl.u32 %v1118, 7
        %v1120 = vsub.s32 %v1117, %v1119
        %v1121 = vrot.slane %v1114, %v1120
        %v1122 = vcombine.low %v1071, %v1087
        %v1124 = vunpack.c.l.s4 1983009808
        %v1125 = vunpack.c.0.s8 %v1124
        %v1126 = vlaneseq
        %v1127 = vshrl.u32 %v1126, 7
        %v1128 = vsub.s32 %v1125, %v1127
        %v1129 = vrot.slane %v1122, %v1128
        %v1130 = vcombine.low %v1121, %v1129
        %v1132 = vunpack.c.l.s4 1934713408
        %v1133 = vunpack.c.0.s8 %v1132
        %v1134 = vlaneseq
        %v1135 = vshrl.u32 %v1134, 7
        %v1136 = vsub.s32 %v1133, %v1135
        %v1137 = vrot.slane %v1130, %v1136
        %v1138 = vcombine.high %v1137, 0
        %v1141 = vpack.i.b16 %v1137, %v1112
        %v1143 = vshrl.u32 %v1112, 16
        %v1144 = vshrl.u32 %v1137, 16
        %v1145 = vpack.i.b16 %v1144, %v1143
        %v1149 = vpack.i.b16 %v1138, %v1113
        %v1151 = vshrl.u32 %v1113, 16
        %v1152 = vshrl.u32 %v1138, 16
        %v1153 = vpack.i.b16 %v1152, %v1151
        %1155 = vst.msk [vmem:[%s430] sm:$0xf] %vm674, %v1141
        %1156 = vst.msk [vmem:[%s430 + $0x4] sm:$0xf] %vm674, %v1145
        %1157 = vst.msk [vmem:[%s430 + $0x8] sm:$0xf] %vm674, %v1149
        %1158 = vst.msk [vmem:[%s430 + $0xc] sm:$0xf] %vm674, %v1153
        %s1159 = sand.u32 %s208, 1
        %s1160 = scalar_lea.sflag [#allocation4], %s1159
        %s1161 = sand.u32 %s208, 1
        %s1162 = smul.addr %s1161, 16
        %s1163 = scalar_lea.vmem [#allocation10], %s1162
        %s1164 = sand.u32 %s32, 1
        %s1165 = scalar_lea.sflag [#allocation12], %s1164
        %s1166 = sand.u32 %s236, 1
        %s1167 = smul.addr %s1166, 16
        %s1168 = scalar_lea.vmem [#allocation11], %s1167
        %s1169 = sand.u32 %s32, 1
        %s1170 = scalar_lea.sflag [#allocation12], %s1169
        %s1171 = sand.u32 %s264, 1
        %s1172 = smul.addr %s1171, 16
        %s1173 = scalar_lea.vmem [#allocation13], %s1172
        // Predicated region
        $region65: #{tpu_custom_call.1} parent=47 // pred_check
          %p1174 = pneg %p218
        $region66: #{tpu_custom_call.1} parent=47 // pred_check_branch
          %1176 = sbr.rel (%p1174) target = $region68
        $region67: #{tpu_custom_call.1} parent=47 // pred_region
          %s1178 = ssub.s32 256, 256
          %1179 = vsyncadd %s1160, %s1178
          %s1180 = smul.addr %s36, 4
          %s1181 = sadd.s32 %s37, %s1180
          %s1182 = smul.addr %s1181, 64
          %s1183 = scalar_lea.hbm %s7, %s1182
          %s1184 = sshll.u32 %s1163, 4
          %s1185 = int_to_ptr.vmem [resolvable:$true] %s1184
          %1190 = dma.vmem_to_hbm [thread:$0]  %s1185, 256, %s1183, %s1160, 64, 64, 4
        $region68: #{tpu_custom_call.1} parent=47 // pred_fallthru
          _
        // Predicated region
        $region69: #{tpu_custom_call.1} parent=47 // pred_check
          %p1191 = pneg %p246
        $region70: #{tpu_custom_call.1} parent=47 // pred_check_branch
          %1193 = sbr.rel (%p1191) target = $region72
        $region71: #{tpu_custom_call.1} parent=47 // pred_region
          %s1195 = ssub.s32 256, 256
          %1196 = vsyncadd %s1165, %s1195
          %s1197 = smul.addr %s36, 4
          %s1198 = sadd.s32 %s37, %s1197
          %s1199 = smul.addr %s1198, 64
          %s1200 = scalar_lea.hbm %s8, %s1199
          %s1201 = sshll.u32 %s1168, 4
          %s1202 = int_to_ptr.vmem [resolvable:$true] %s1201
          %1207 = dma.vmem_to_hbm [thread:$0]  %s1202, 256, %s1200, %s1165, 64, 64, 4
        $region72: #{tpu_custom_call.1} parent=47 // pred_fallthru
          _
        // Predicated region
        $region73: #{tpu_custom_call.1} parent=47 // pred_check
          %p1208 = pneg %p274
        $region74: #{tpu_custom_call.1} parent=47 // pred_check_branch
          %1210 = sbr.rel (%p1208) target = $region76
        $region75: #{tpu_custom_call.1} parent=47 // pred_region
          %s1212 = ssub.s32 256, 256
          %1213 = vsyncadd %s1170, %s1212
          %s1214 = smul.addr %s36, 4
          %s1215 = sadd.s32 %s37, %s1214
          %s1216 = smul.addr %s1215, 64
          %s1217 = scalar_lea.hbm %s9, %s1216
          %s1218 = sshll.u32 %s1173, 4
          %s1219 = int_to_ptr.vmem [resolvable:$true] %s1218
          %1224 = dma.vmem_to_hbm [thread:$0]  %s1219, 256, %s1217, %s1170, 64, 64, 4
        $region76: #{tpu_custom_call.1} parent=47 // pred_fallthru
          _
      $region48: #{tpu_custom_call.1} parent=5 // pred_fallthru
        _
      %p1225 = scmp.le.s32.totalorder 2, %s27
      // Predicated region
      $region77: #{tpu_custom_call.1} parent=5 // pred_check
        %p1226 = pneg %p1225
      $region78: #{tpu_custom_call.1} parent=5 // pred_check_branch
        %1228 = sbr.rel (%p1226) target = $region80
      $region79: #{tpu_custom_call.1} parent=5 // pred_region
        %s1229 = ssub.s32 %s27, 2
        // Predicated region
        $region81: #{tpu_custom_call.1} parent=79 // pred_check
          %p1230 = pneg %p224
        $region82: #{tpu_custom_call.1} parent=79 // pred_check_branch
          %1232 = sbr.rel (%p1230) target = $region84
        $region83: #{tpu_custom_call.1} parent=79 // pred_region
          %s1233 = sand.u32 %s209, 1
          %s1234 = scalar_lea.sflag [#allocation4], %s1233
          %s1235 = sand.u32 %s209, 1
          %s1236 = smul.addr %s1235, 16
          %s1237 = scalar_lea.vmem [#allocation10], %s1236
          %1238 = dma.done %s1234, 256
        $region84: #{tpu_custom_call.1} parent=79 // pred_fallthru
          _
        // Predicated region
        $region85: #{tpu_custom_call.1} parent=79 // pred_check
          %p1239 = pneg %p252
        $region86: #{tpu_custom_call.1} parent=79 // pred_check_branch
          %1241 = sbr.rel (%p1239) target = $region88
        $region87: #{tpu_custom_call.1} parent=79 // pred_region
          %s1242 = sand.u32 %s33, 1
          %s1243 = scalar_lea.sflag [#allocation12], %s1242
          %s1244 = sand.u32 %s237, 1
          %s1245 = smul.addr %s1244, 16
          %s1246 = scalar_lea.vmem [#allocation11], %s1245
          %1247 = dma.done %s1243, 256
        $region88: #{tpu_custom_call.1} parent=79 // pred_fallthru
          _
        // Predicated region
        $region89: #{tpu_custom_call.1} parent=79 // pred_check
          %p1248 = pneg %p280
        $region90: #{tpu_custom_call.1} parent=79 // pred_check_branch
          %1250 = sbr.rel (%p1248) target = $region92
        $region91: #{tpu_custom_call.1} parent=79 // pred_region
          %s1251 = sand.u32 %s33, 1
          %s1252 = scalar_lea.sflag [#allocation12], %s1251
          %s1253 = sand.u32 %s265, 1
          %s1254 = smul.addr %s1253, 16
          %s1255 = scalar_lea.vmem [#allocation13], %s1254
          %1256 = dma.done %s1252, 256
        $region92: #{tpu_custom_call.1} parent=79 // pred_fallthru
          _
      $region80: #{tpu_custom_call.1} parent=5 // pred_fallthru
        _
    $region6: #{tpu_custom_call.1} parent=1 // loop_footer
      %s31 = sadd.s32 1, %s27
    $region7: #{tpu_custom_call.1} parent=1 // loop_footer_branch
      %26 = sbr.rel target = $region3
    $region8: #{tpu_custom_call.1} parent=1 // loop_exit
      _
    %1257 = vsyncpa [#allocation3], 1
    %s1258 = scalar_lea.sflag [#allocation3], 1
    %1259 = vsyncpa %s1258, 1
    %1260 = vsyncpa [#allocation6], 1
    %1261 = vsyncpa [#allocation9], 1
    %1262 = vsyncpa [#allocation4], 1
    %s1263 = scalar_lea.sflag [#allocation4], 1
    %1264 = vsyncpa %s1263, 1
    %1265 = vsyncpa [#allocation12], 1
    %s1266 = scalar_lea.sflag [#allocation12], 1
    %1267 = vsyncpa %s1266, 1

</llo_original>
